<compile_context>
chip_gen: v5e
topology: v5e:2x2
jax: 0.10.0
libtpu: 0.0.40
codegen_flags: <defaults>
</compile_context>

<pallas_src>
import functools

import jax
import jax.numpy as jnp
from jax.experimental import pallas as pl
from jax.experimental.pallas import tpu as pltpu


# ---------------------------------------------------------------------------
# Small helpers: padding / tile selection
# ---------------------------------------------------------------------------

def _round_up(x, m):
    return (x + m - 1) // m * m


def _fit(dim, target, align):
    """Return (padded_dim, tile) with tile | padded_dim and tile % align == 0."""
    d = _round_up(dim, align)
    if d <= target:
        return d, d
    return _round_up(d, target), target


def _pad2(a, rows, cols):
    r, c = a.shape
    if r == rows and c == cols:
        return a
    return jnp.pad(a, ((0, rows - r), (0, cols - c)))


# ---------------------------------------------------------------------------
# Kernels
# ---------------------------------------------------------------------------

def _matmul_bias_kernel(x_ref, w_ref, b_ref, o_ref, acc_ref):
    # grid = (M/tm, N/tn, K/tk); accumulate over K in a VMEM scratch.
    @pl.when(pl.program_id(2) == 0)
    def _():
        acc_ref[...] = jnp.zeros_like(acc_ref)

    acc_ref[...] += jnp.dot(
        x_ref[...].astype(jnp.bfloat16), w_ref[...],
        preferred_element_type=jnp.float32)

    @pl.when(pl.program_id(2) == pl.num_programs(2) - 1)
    def _():
        o_ref[...] = acc_ref[...] + b_ref[...]


def _layernorm_rows(y, gamma, beta, d_actual):
    # Biased variance, eps=1e-12; padded lane columns of y are exactly 0, so
    # E[x] / E[x^2] computed with the true feature count stay correct.
    inv_d = 1.0 / float(d_actual)
    mean = jnp.sum(y, axis=-1, keepdims=True) * inv_d
    var = jnp.sum(y * y, axis=-1, keepdims=True) * inv_d - mean * mean
    xhat = (y - mean) * jax.lax.rsqrt(var + 1e-12)
    return gamma * xhat + beta


def _linear_add_ln_kernel(x_ref, w_ref, b_ref, r_ref, g_ref, bt_ref,
                          o_ref, acc_ref, *, d_actual):
    # grid = (M/tm, K/tk); N (= d_model) kept whole so LayerNorm can fuse.
    @pl.when(pl.program_id(1) == 0)
    def _():
        acc_ref[...] = jnp.zeros_like(acc_ref)

    acc_ref[...] += jnp.dot(
        x_ref[...].astype(jnp.bfloat16), w_ref[...],
        preferred_element_type=jnp.float32)

    @pl.when(pl.program_id(1) == pl.num_programs(1) - 1)
    def _():
        y = acc_ref[...] + b_ref[...] + r_ref[...]
        o_ref[...] = _layernorm_rows(y, g_ref[...], bt_ref[...], d_actual)


def _ffn_add_ln_kernel(x_ref, w1_ref, b1_ref, w2_ref, b2_ref, g_ref, bt_ref,
                       o_ref, *, d_actual):
    # grid = (M/tm,); residual of the FFN block is its own input.
    x = x_ref[...]
    h = jnp.dot(x.astype(jnp.bfloat16), w1_ref[...],
                preferred_element_type=jnp.float32) + b1_ref[...]
    h = jnp.maximum(h, 0.0)
    y = jnp.dot(h.astype(jnp.bfloat16), w2_ref[...],
                preferred_element_type=jnp.float32) + b2_ref[...]
    y = y + x
    o_ref[...] = _layernorm_rows(y, g_ref[...], bt_ref[...], d_actual)


def _attn_kernel(q_ref, k_ref, v_ref, bias_ref, o_ref, *, n_head):
    # One (batch, q-tile) per grid step; all heads handled in-kernel so the
    # output is written lane-dense in [tq, H*dh] layout.
    q = q_ref[0]          # [tq, D]
    k = k_ref[0]          # [S , D]
    v = v_ref[0]          # [S , D]
    bias = bias_ref[0]    # [tq, S]  additive mask bias
    d_model = q.shape[-1]
    dh = d_model // n_head
    scale = 1.0 / (float(dh) ** 0.5)

    outs = []
    for h in range(n_head):
        lo, hi = h * dh, (h + 1) * dh
        qh = q[:, lo:hi].astype(jnp.bfloat16)
        kh = k[:, lo:hi].astype(jnp.bfloat16)
        vh = v[:, lo:hi].astype(jnp.bfloat16)
        s = jnp.einsum("qd,kd->qk", qh, kh,
                       preferred_element_type=jnp.float32) * scale + bias
        s = s - jnp.max(s, axis=-1, keepdims=True)
        p = jnp.exp(s)
        p = p * pl.reciprocal(jnp.sum(p, axis=-1, keepdims=True), approx=True)
        outs.append(jnp.dot(p.astype(jnp.bfloat16), vh,
                            preferred_element_type=jnp.float32))
    o_ref[0] = jnp.concatenate(outs, axis=-1)


# ---------------------------------------------------------------------------
# pallas_call wrappers
# ---------------------------------------------------------------------------

def linear(x, w, b, *, tm=256, tn=256, tk=512):
    """x:[M,K] f32, w:[K,N] bf16, b:[1,N] f32 -> [M,N] f32 (tiled, pipelined)."""
    M, K = x.shape
    N = w.shape[1]
    Mp, tm = _fit(M, tm, 8)
    Kp, tk = _fit(K, tk, 128)
    Np, tn = _fit(N, tn, 128)
    xp, wp, bp = _pad2(x, Mp, Kp), _pad2(w, Kp, Np), _pad2(b, 1, Np)

    out = pl.pallas_call(
        _matmul_bias_kernel,
        out_shape=jax.ShapeDtypeStruct((Mp, Np), jnp.float32),
        grid=(Mp // tm, Np // tn, Kp // tk),
        in_specs=[pl.BlockSpec((tm, tk), lambda i, j, k: (i, k)),
                  pl.BlockSpec((tk, tn), lambda i, j, k: (k, j)),
                  pl.BlockSpec((1, tn), lambda i, j, k: (0, j))],
        out_specs=pl.BlockSpec((tm, tn), lambda i, j, k: (i, j)),
        scratch_shapes=[pltpu.VMEM((tm, tn), jnp.float32)],
        compiler_params=pltpu.CompilerParams(
            dimension_semantics=("parallel", "parallel", "arbitrary")),
        cost_estimate=pl.CostEstimate(
            flops=2 * Mp * Np * Kp, transcendentals=0,
            bytes_accessed=4 * Mp * Kp + 2 * Kp * Np + 4 * Mp * Np),
    )(xp, wp, bp)
    return out[:M, :N]


def linear_add_layernorm(x, w, b, res, gamma, beta, *, tm=256, tk=512):
    """(x @ w + b + res) -> LayerNorm, fused. x:[M,K], w:[K,D], res:[M,D]."""
    M, K = x.shape
    N = w.shape[1]
    Mp, tm = _fit(M, tm, 8)
    Kp, tk = _fit(K, tk, 128)
    Np = _round_up(N, 128)
    xp, wp, bp = _pad2(x, Mp, Kp), _pad2(w, Kp, Np), _pad2(b, 1, Np)
    rp = _pad2(res, Mp, Np)
    gp, btp = _pad2(gamma, 1, Np), _pad2(beta, 1, Np)

    kernel = functools.partial(_linear_add_ln_kernel, d_actual=N)
    out = pl.pallas_call(
        kernel,
        out_shape=jax.ShapeDtypeStruct((Mp, Np), jnp.float32),
        grid=(Mp // tm, Kp // tk),
        in_specs=[pl.BlockSpec((tm, tk), lambda i, k: (i, k)),
                  pl.BlockSpec((tk, Np), lambda i, k: (k, 0)),
                  pl.BlockSpec((1, Np), lambda i, k: (0, 0)),
                  pl.BlockSpec((tm, Np), lambda i, k: (i, 0)),
                  pl.BlockSpec((1, Np), lambda i, k: (0, 0)),
                  pl.BlockSpec((1, Np), lambda i, k: (0, 0))],
        out_specs=pl.BlockSpec((tm, Np), lambda i, k: (i, 0)),
        scratch_shapes=[pltpu.VMEM((tm, Np), jnp.float32)],
        compiler_params=pltpu.CompilerParams(
            dimension_semantics=("parallel", "arbitrary")),
        cost_estimate=pl.CostEstimate(
            flops=2 * Mp * Np * Kp, transcendentals=0,
            bytes_accessed=4 * Mp * Kp + 2 * Kp * Np + 8 * Mp * Np),
    )(xp, wp, bp, rp, gp, btp)
    return out[:M, :N]


def ffn_add_layernorm(x, w1, b1, w2, b2, gamma, beta, *, tm=256):
    """LayerNorm(relu(x@w1+b1)@w2 + b2 + x), fused, row-tiled."""
    M, D = x.shape
    Hf = w1.shape[1]
    Mp, tm = _fit(M, tm, 8)
    Dp = _round_up(D, 128)
    Hfp = _round_up(Hf, 128)
    xp = _pad2(x, Mp, Dp)
    w1p, b1p = _pad2(w1, Dp, Hfp), _pad2(b1, 1, Hfp)
    w2p, b2p = _pad2(w2, Hfp, Dp), _pad2(b2, 1, Dp)
    gp, btp = _pad2(gamma, 1, Dp), _pad2(beta, 1, Dp)

    kernel = functools.partial(_ffn_add_ln_kernel, d_actual=D)
    out = pl.pallas_call(
        kernel,
        out_shape=jax.ShapeDtypeStruct((Mp, Dp), jnp.float32),
        grid=(Mp // tm,),
        in_specs=[pl.BlockSpec((tm, Dp), lambda i: (i, 0)),
                  pl.BlockSpec((Dp, Hfp), lambda i: (0, 0)),
                  pl.BlockSpec((1, Hfp), lambda i: (0, 0)),
                  pl.BlockSpec((Hfp, Dp), lambda i: (0, 0)),
                  pl.BlockSpec((1, Dp), lambda i: (0, 0)),
                  pl.BlockSpec((1, Dp), lambda i: (0, 0)),
                  pl.BlockSpec((1, Dp), lambda i: (0, 0))],
        out_specs=pl.BlockSpec((tm, Dp), lambda i: (i, 0)),
        compiler_params=pltpu.CompilerParams(
            dimension_semantics=("parallel",)),
        cost_estimate=pl.CostEstimate(
            flops=4 * Mp * Dp * Hfp, transcendentals=0,
            bytes_accessed=8 * Mp * Dp + 4 * Dp * Hfp),
    )(xp, w1p, b1p, w2p, b2p, gp, btp)
    return out[:M, :D]


def attention_core(q, k, v, bias, n_head):
    """q,k,v: [B,S,D] f32 (heads packed along D), bias: [B,S,S] -> [B,S,D]."""
    B, S, D = q.shape
    if S <= 512:
        tq = S
    elif S % 256 == 0:
        tq = 256
    else:
        tq = S
    kernel = functools.partial(_attn_kernel, n_head=n_head)
    return pl.pallas_call(
        kernel,
        out_shape=jax.ShapeDtypeStruct((B, S, D), jnp.float32),
        grid=(B, S // tq),
        in_specs=[pl.BlockSpec((1, tq, D), lambda b, i: (b, i, 0)),
                  pl.BlockSpec((1, S, D), lambda b, i: (b, 0, 0)),
                  pl.BlockSpec((1, S, D), lambda b, i: (b, 0, 0)),
                  pl.BlockSpec((1, tq, S), lambda b, i: (b, i, 0))],
        out_specs=pl.BlockSpec((1, tq, D), lambda b, i: (b, i, 0)),
        compiler_params=pltpu.CompilerParams(
            dimension_semantics=("parallel", "parallel")),
    )(q, k, v, bias)


# ---------------------------------------------------------------------------
# Model glue (plain JAX: embedding gather, reshapes, parameter plumbing)
# ---------------------------------------------------------------------------

def decoder_layer(p, dec, enc, t_bias, s_bias, n_head):
    B, S, D = dec.shape
    dec2 = dec.reshape(B * S, D)

    # --- masked self-attention block (fused QKV projection) ---
    qkv = linear(dec2, p["a1_wqkv"], p["a1_bqkv"])                    # [B*S, 3D]
    q, k, v = (t.reshape(B, S, D) for t in jnp.split(qkv, 3, axis=-1))
    o = attention_core(q, k, v, t_bias, n_head)                       # [B, S, D]
    x = linear_add_layernorm(o.reshape(B * S, D), p["a1_wo"], p["a1_bo"],
                             dec2, p["g1"], p["b1"]).reshape(B, S, D)

    # --- cross attention (literal reference routing: q=x, k=dec, v=enc) ---
    q = linear(x.reshape(B * S, D), p["c_wq"], p["c_bq"]).reshape(B, S, D)
    k = linear(dec2, p["c_wk"], p["c_bk"]).reshape(B, S, D)
    v = linear(enc.reshape(B * S, D), p["c_wv"], p["c_bv"]).reshape(B, S, D)
    o = attention_core(q, k, v, s_bias, n_head)
    x = linear_add_layernorm(o.reshape(B * S, D), p["c_wo"], p["c_bo"],
                             x.reshape(B * S, D), p["g2"], p["b2"]).reshape(B, S, D)

    # --- position-wise feed-forward + add & norm (fully fused) ---
    x = ffn_add_layernorm(x.reshape(B * S, D), p["ffn_w1"], p["ffn_b1"],
                          p["ffn_w2"], p["ffn_b2"], p["g3"], p["b3"])
    return x.reshape(B, S, D)


def sinusoidal_pe(max_len, d_model):
    pos = jnp.arange(max_len, dtype=jnp.float32)[:, None]
    i = jnp.arange(d_model, dtype=jnp.float32)[None, :]
    angle = pos / jnp.power(10000.0, (2.0 * jnp.floor(i / 2.0)) / d_model)
    return jnp.where((jnp.arange(d_model) % 2) == 0, jnp.sin(angle), jnp.cos(angle))


@functools.partial(jax.jit, static_argnames=("n_head",))
def decoder_forward(params, dec_tokens, enc, t_mask, s_mask, n_head):
    B, S = dec_tokens.shape
    D = params["emb"].shape[1]

    # embedding + positional encoding (gather stays in plain JAX)
    x = jnp.take(params["emb"], dec_tokens, axis=0) + params["pe"][:S][None, :, :]

    # additive mask biases, computed once per forward (masked_fill(-10000) equiv.)
    t_bias = (t_mask[:, 0].astype(jnp.float32) - 1.0) * 10000.0
    if s_mask is None:
        s_bias = jnp.zeros((B, S, S), jnp.float32)
    else:
        s_bias = (s_mask[:, 0].astype(jnp.float32) - 1.0) * 10000.0

    for lp in params["layers"]:
        x = decoder_layer(lp, x, enc, t_bias, s_bias, n_head)

    logits = linear(x.reshape(B * S, D), params["fc_w"], params["fc_b"])
    return logits.reshape(B, S, -1)


def init_params(key, voc, max_len, d_model, ffn_hidden, n_head, n_layer):
    scale = 0.02

    def dense(k, din, dout):
        w = (scale * jax.random.normal(k, (din, dout), jnp.float32)).astype(jnp.bfloat16)
        return w, jnp.zeros((1, dout), jnp.float32)

    keys = iter(jax.random.split(key, 4 + 10 * n_layer))
    params = {
        "emb": scale * jax.random.normal(next(keys), (voc, d_model), jnp.float32),
        "pe": sinusoidal_pe(max_len, d_model),
        "layers": [],
    }
    ones = jnp.ones((1, d_model), jnp.float32)
    zeros = jnp.zeros((1, d_model), jnp.float32)
    for _ in range(n_layer):
        a1_wqkv, a1_bqkv = dense(next(keys), d_model, 3 * d_model)
        a1_wo, a1_bo = dense(next(keys), d_model, d_model)
        c_wq, c_bq = dense(next(keys), d_model, d_model)
        c_wk, c_bk = dense(next(keys), d_model, d_model)
        c_wv, c_bv = dense(next(keys), d_model, d_model)
        c_wo, c_bo = dense(next(keys), d_model, d_model)
        w1, b1 = dense(next(keys), d_model, ffn_hidden)
        w2, b2 = dense(next(keys), ffn_hidden, d_model)
        params["layers"].append({
            "a1_wqkv": a1_wqkv, "a1_bqkv": a1_bqkv, "a1_wo": a1_wo, "a1_bo": a1_bo,
            "c_wq": c_wq, "c_bq": c_bq, "c_wk": c_wk, "c_bk": c_bk,
            "c_wv": c_wv, "c_bv": c_bv, "c_wo": c_wo, "c_bo": c_bo,
            "ffn_w1": w1, "ffn_b1": b1, "ffn_w2": w2, "ffn_b2": b2,
            "g1": ones, "b1": zeros, "g2": ones, "b2": zeros, "g3": ones, "b3": zeros,
        })
    fw, fb = dense(next(keys), d_model, voc)
    params["fc_w"], params["fc_b"] = fw, fb
    return params


if __name__ == "__main__":
    B, S = 2, 8
    d_model, ffn_hidden, n_head, n_layer = 32, 64, 4, 2
    voc, max_len = 50, 16

    root = jax.random.PRNGKey(0)
    k_par, k_tok, k_enc = jax.random.split(root, 3)

    params = init_params(k_par, voc, max_len, d_model, ffn_hidden, n_head, n_layer)
    dec_tokens = jax.random.randint(k_tok, (B, S), 0, voc, dtype=jnp.int32)
    enc = jax.random.normal(k_enc, (B, S, d_model), jnp.float32)

    # causal target mask [B, 1, S, S]; source mask all-ones
    t_mask = jnp.broadcast_to(jnp.tril(jnp.ones((S, S), jnp.float32)), (B, 1, S, S))
    s_mask = jnp.ones((B, 1, S, S), jnp.float32)

    out = decoder_forward(params, dec_tokens, enc, t_mask, s_mask, n_head)
    jax.block_until_ready(out)
    assert out.shape == (B, S, voc), out.shape
    print("KERNEL_OK")
</pallas_src>

<mosaic_0001>
module attributes {stable_mosaic.version = 11 : i64} {
  func.func @_matmul_bias_kernel(%arg0: i32, %arg1: i32, %arg2: i32, %arg3: memref<16x128xf32, #tpu.memory_space<vmem>>, %arg4: memref<128x128xbf16, #tpu.memory_space<vmem>>, %arg5: memref<1x128xf32, #tpu.memory_space<vmem>>, %arg6: memref<16x128xf32, #tpu.memory_space<vmem>>, %arg7: memref<16x128xf32, #tpu.memory_space<vmem>>) attributes {dimension_semantics = [#tpu.dimension_semantics<parallel>, #tpu.dimension_semantics<parallel>, #tpu.dimension_semantics<arbitrary>], iteration_bounds = array<i64: 1, 1, 1>, scalar_prefetch = 0 : i64, scratch_operands = 1 : i64, tpu.core_type = #tpu.core_type<tc>, window_params = [{transform_indices = @transform_0, window_bounds = array<i64: 16, 128>}, {transform_indices = @transform_1, window_bounds = array<i64: 128, 128>}, {transform_indices = @transform_2, window_bounds = array<i64: 1, 128>}, {transform_indices = @transform_3, window_bounds = array<i64: 16, 128>}]} {
    %c0_i32 = arith.constant 0 : i32
    %0 = arith.cmpi eq, %arg2, %c0_i32 : i32
    %1 = arith.extui %0 : i1 to i32
    %c0_i32_0 = arith.constant 0 : i32
    %2 = arith.cmpi ne, %1, %c0_i32_0 : i32
    scf.if %2 {
      %cst_10 = arith.constant 0.000000e+00 : f32
      %13 = vector.broadcast %cst_10 : f32 to vector<16x128xf32>
      %c0_11 = arith.constant 0 : index
      %c0_12 = arith.constant 0 : index
      %14 = vector.load %arg7[%c0_11, %c0_12] : memref<16x128xf32, #tpu.memory_space<vmem>>, vector<16x128xf32>
      tpu.vector_store %arg7[%c0_11, %c0_12], %13 {strides = array<i32>} : memref<16x128xf32, #tpu.memory_space<vmem>>, vector<16x128xf32>,
    } else {
    }
    %c0 = arith.constant 0 : index
    %c0_1 = arith.constant 0 : index
    %3 = vector.load %arg7[%c0, %c0_1] : memref<16x128xf32, #tpu.memory_space<vmem>>, vector<16x128xf32>
    %c0_2 = arith.constant 0 : index
    %c0_3 = arith.constant 0 : index
    %4 = vector.load %arg3[%c0_2, %c0_3] : memref<16x128xf32, #tpu.memory_space<vmem>>, vector<16x128xf32>
    %5 = arith.truncf %4 : vector<16x128xf32> to vector<16x128xbf16>
    %c0_4 = arith.constant 0 : index
    %c0_5 = arith.constant 0 : index
    %6 = vector.load %arg4[%c0_4, %c0_5] : memref<128x128xbf16, #tpu.memory_space<vmem>>, vector<128x128xbf16>
    %cst = arith.constant dense<0.000000e+00> : vector<16x128xf32>
    %7 = tpu.matmul %5, %6, %cst {dimension_numbers = #tpu.dot_dimension_numbers<[1], [0], [0], [1], [0, 0, 1, 1], [], []>} : vector<16x128xbf16>, vector<128x128xbf16>, vector<16x128xf32> -> vector<16x128xf32>
    %8 = arith.addf %3, %7 : vector<16x128xf32>
    %c0_6 = arith.constant 0 : index
    %c0_7 = arith.constant 0 : index
    %9 = vector.load %arg7[%c0_6, %c0_7] : memref<16x128xf32, #tpu.memory_space<vmem>>, vector<16x128xf32>
    tpu.vector_store %arg7[%c0_6, %c0_7], %8 {strides = array<i32>} : memref<16x128xf32, #tpu.memory_space<vmem>>, vector<16x128xf32>,
    %c0_i32_8 = arith.constant 0 : i32
    %10 = arith.cmpi eq, %arg2, %c0_i32_8 : i32
    %11 = arith.extui %10 : i1 to i32
    %c0_i32_9 = arith.constant 0 : i32
    %12 = arith.cmpi ne, %11, %c0_i32_9 : i32
    scf.if %12 {
      %c0_10 = arith.constant 0 : index
      %c0_11 = arith.constant 0 : index
      %13 = vector.load %arg7[%c0_10, %c0_11] : memref<16x128xf32, #tpu.memory_space<vmem>>, vector<16x128xf32>
      %c0_12 = arith.constant 0 : index
      %c0_13 = arith.constant 0 : index
      %14 = vector.load %arg5[%c0_12, %c0_13] : memref<1x128xf32, #tpu.memory_space<vmem>>, vector<1x128xf32>
      %15 = vector.broadcast %14 : vector<1x128xf32> to vector<16x128xf32>
      %16 = arith.addf %13, %15 : vector<16x128xf32>
      %c0_14 = arith.constant 0 : index
      %c0_15 = arith.constant 0 : index
      %17 = vector.load %arg6[%c0_14, %c0_15] : memref<16x128xf32, #tpu.memory_space<vmem>>, vector<16x128xf32>
      tpu.vector_store %arg6[%c0_14, %c0_15], %16 {strides = array<i32>} : memref<16x128xf32, #tpu.memory_space<vmem>>, vector<16x128xf32>,
    } else {
    }
    return
  }
  func.func @transform_0(%arg0: i32, %arg1: i32, %arg2: i32) -> (i32, i32) {
    %c0_i32 = arith.constant 0 : i32
    return %arg0, %arg2 : i32, i32
  }
  func.func @transform_1(%arg0: i32, %arg1: i32, %arg2: i32) -> (i32, i32) {
    %c0_i32 = arith.constant 0 : i32
    return %arg2, %arg1 : i32, i32
  }
  func.func @transform_2(%arg0: i32, %arg1: i32, %arg2: i32) -> (i32, i32) {
    %c0_i32 = arith.constant 0 : i32
    %c0_i32_0 = arith.constant 0 : i32
    return %c0_i32, %arg1 : i32, i32
  }
  func.func @transform_3(%arg0: i32, %arg1: i32, %arg2: i32) -> (i32, i32) {
    %c0_i32 = arith.constant 0 : i32
    return %arg0, %arg1 : i32, i32
  }
}

module attributes {stable_mosaic.version = 11 : i64} {
  func.func @_linear_add_ln_kernel(%arg0: i32, %arg1: i32, %arg2: memref<16x128xf32, #tpu.memory_space<vmem>>, %arg3: memref<128x128xbf16, #tpu.memory_space<vmem>>, %arg4: memref<1x128xf32, #tpu.memory_space<vmem>>, %arg5: memref<16x128xf32, #tpu.memory_space<vmem>>, %arg6: memref<1x128xf32, #tpu.memory_space<vmem>>, %arg7: memref<1x128xf32, #tpu.memory_space<vmem>>, %arg8: memref<16x128xf32, #tpu.memory_space<vmem>>, %arg9: memref<16x128xf32, #tpu.memory_space<vmem>>) attributes {dimension_semantics = [#tpu.dimension_semantics<parallel>, #tpu.dimension_semantics<arbitrary>], iteration_bounds = array<i64: 1, 1>, scalar_prefetch = 0 : i64, scratch_operands = 1 : i64, tpu.core_type = #tpu.core_type<tc>, window_params = [{transform_indices = @transform_0, window_bounds = array<i64: 16, 128>}, {transform_indices = @transform_1, window_bounds = array<i64: 128, 128>}, {pipeline_mode = #tpu.pipeline_mode<synchronous>, transform_indices = @transform_2, window_bounds = array<i64: 1, 128>}, {transform_indices = @transform_3, window_bounds = array<i64: 16, 128>}, {pipeline_mode = #tpu.pipeline_mode<synchronous>, transform_indices = @transform_4, window_bounds = array<i64: 1, 128>}, {pipeline_mode = #tpu.pipeline_mode<synchronous>, transform_indices = @transform_5, window_bounds = array<i64: 1, 128>}, {transform_indices = @transform_6, window_bounds = array<i64: 16, 128>}]} {
    %c0_i32 = arith.constant 0 : i32
    %0 = arith.cmpi eq, %arg1, %c0_i32 : i32
    %1 = arith.extui %0 : i1 to i32
    %c0_i32_0 = arith.constant 0 : i32
    %2 = arith.cmpi ne, %1, %c0_i32_0 : i32
    scf.if %2 {
      %cst_10 = arith.constant 0.000000e+00 : f32
      %13 = vector.broadcast %cst_10 : f32 to vector<16x128xf32>
      %c0_11 = arith.constant 0 : index
      %c0_12 = arith.constant 0 : index
      %14 = vector.load %arg9[%c0_11, %c0_12] : memref<16x128xf32, #tpu.memory_space<vmem>>, vector<16x128xf32>
      tpu.vector_store %arg9[%c0_11, %c0_12], %13 {strides = array<i32>} : memref<16x128xf32, #tpu.memory_space<vmem>>, vector<16x128xf32>,
    } else {
    }
    %c0 = arith.constant 0 : index
    %c0_1 = arith.constant 0 : index
    %3 = vector.load %arg9[%c0, %c0_1] : memref<16x128xf32, #tpu.memory_space<vmem>>, vector<16x128xf32>
    %c0_2 = arith.constant 0 : index
    %c0_3 = arith.constant 0 : index
    %4 = vector.load %arg2[%c0_2, %c0_3] : memref<16x128xf32, #tpu.memory_space<vmem>>, vector<16x128xf32>
    %5 = arith.truncf %4 : vector<16x128xf32> to vector<16x128xbf16>
    %c0_4 = arith.constant 0 : index
    %c0_5 = arith.constant 0 : index
    %6 = vector.load %arg3[%c0_4, %c0_5] : memref<128x128xbf16, #tpu.memory_space<vmem>>, vector<128x128xbf16>
    %cst = arith.constant dense<0.000000e+00> : vector<16x128xf32>
    %7 = tpu.matmul %5, %6, %cst {dimension_numbers = #tpu.dot_dimension_numbers<[1], [0], [0], [1], [0, 0, 1, 1], [], []>} : vector<16x128xbf16>, vector<128x128xbf16>, vector<16x128xf32> -> vector<16x128xf32>
    %8 = arith.addf %3, %7 : vector<16x128xf32>
    %c0_6 = arith.constant 0 : index
    %c0_7 = arith.constant 0 : index
    %9 = vector.load %arg9[%c0_6, %c0_7] : memref<16x128xf32, #tpu.memory_space<vmem>>, vector<16x128xf32>
    tpu.vector_store %arg9[%c0_6, %c0_7], %8 {strides = array<i32>} : memref<16x128xf32, #tpu.memory_space<vmem>>, vector<16x128xf32>,
    %c0_i32_8 = arith.constant 0 : i32
    %10 = arith.cmpi eq, %arg1, %c0_i32_8 : i32
    %11 = arith.extui %10 : i1 to i32
    %c0_i32_9 = arith.constant 0 : i32
    %12 = arith.cmpi ne, %11, %c0_i32_9 : i32
    scf.if %12 {
      %c0_10 = arith.constant 0 : index
      %c0_11 = arith.constant 0 : index
      %13 = vector.load %arg9[%c0_10, %c0_11] : memref<16x128xf32, #tpu.memory_space<vmem>>, vector<16x128xf32>
      %c0_12 = arith.constant 0 : index
      %c0_13 = arith.constant 0 : index
      %14 = vector.load %arg4[%c0_12, %c0_13] : memref<1x128xf32, #tpu.memory_space<vmem>>, vector<1x128xf32>
      %15 = vector.broadcast %14 : vector<1x128xf32> to vector<16x128xf32>
      %16 = arith.addf %13, %15 : vector<16x128xf32>
      %c0_14 = arith.constant 0 : index
      %c0_15 = arith.constant 0 : index
      %17 = vector.load %arg5[%c0_14, %c0_15] : memref<16x128xf32, #tpu.memory_space<vmem>>, vector<16x128xf32>
      %18 = arith.addf %16, %17 : vector<16x128xf32>
      %c0_16 = arith.constant 0 : index
      %c0_17 = arith.constant 0 : index
      %19 = vector.load %arg6[%c0_16, %c0_17] : memref<1x128xf32, #tpu.memory_space<vmem>>, vector<1x128xf32>
      %c0_18 = arith.constant 0 : index
      %c0_19 = arith.constant 0 : index
      %20 = vector.load %arg7[%c0_18, %c0_19] : memref<1x128xf32, #tpu.memory_space<vmem>>, vector<1x128xf32>
      %cst_20 = arith.constant dense<0.000000e+00> : vector<16xf32>
      %21 = vector.multi_reduction <add>, %18, %cst_20 [1] : vector<16x128xf32> to vector<16xf32>
      %22 = vector.shape_cast %21 : vector<16xf32> to vector<16x1xf32>
      %cst_21 = arith.constant 3.125000e-02 : f32
      %23 = vector.broadcast %cst_21 : f32 to vector<16x1xf32>
      %24 = arith.mulf %22, %23 : vector<16x1xf32>
      %25 = arith.mulf %18, %18 : vector<16x128xf32>
      %cst_22 = arith.constant dense<0.000000e+00> : vector<16xf32>
      %26 = vector.multi_reduction <add>, %25, %cst_22 [1] : vector<16x128xf32> to vector<16xf32>
      %27 = vector.shape_cast %26 : vector<16xf32> to vector<16x1xf32>
      %cst_23 = arith.constant 3.125000e-02 : f32
      %28 = vector.broadcast %cst_23 : f32 to vector<16x1xf32>
      %29 = arith.mulf %27, %28 : vector<16x1xf32>
      %30 = arith.mulf %24, %24 : vector<16x1xf32>
      %31 = arith.subf %29, %30 : vector<16x1xf32>
      %32 = vector.broadcast %24 : vector<16x1xf32> to vector<16x128xf32>
      %33 = arith.subf %18, %32 : vector<16x128xf32>
      %cst_24 = arith.constant 9.99999996E-13 : f32
      %34 = vector.broadcast %cst_24 : f32 to vector<16x1xf32>
      %35 = arith.addf %31, %34 : vector<16x1xf32>
      %36 = math.rsqrt %35 : vector<16x1xf32>
      %37 = vector.broadcast %36 : vector<16x1xf32> to vector<16x128xf32>
      %38 = arith.mulf %33, %37 : vector<16x128xf32>
      %39 = vector.broadcast %19 : vector<1x128xf32> to vector<16x128xf32>
      %40 = arith.mulf %39, %38 : vector<16x128xf32>
      %41 = vector.broadcast %20 : vector<1x128xf32> to vector<16x128xf32>
      %42 = arith.addf %40, %41 : vector<16x128xf32>
      %c0_25 = arith.constant 0 : index
      %c0_26 = arith.constant 0 : index
      %43 = vector.load %arg8[%c0_25, %c0_26] : memref<16x128xf32, #tpu.memory_space<vmem>>, vector<16x128xf32>
      tpu.vector_store %arg8[%c0_25, %c0_26], %42 {strides = array<i32>} : memref<16x128xf32, #tpu.memory_space<vmem>>, vector<16x128xf32>,
    } else {
    }
    return
  }
  func.func @transform_0(%arg0: i32, %arg1: i32) -> (i32, i32) {
    %c0_i32 = arith.constant 0 : i32
    return %arg0, %arg1 : i32, i32
  }
  func.func @transform_1(%arg0: i32, %arg1: i32) -> (i32, i32) {
    %c0_i32 = arith.constant 0 : i32
    %c0_i32_0 = arith.constant 0 : i32
    return %arg1, %c0_i32 : i32, i32
  }
  func.func @transform_2(%arg0: i32, %arg1: i32) -> (i32, i32) {
    %c0_i32 = arith.constant 0 : i32
    %c0_i32_0 = arith.constant 0 : i32
    %c0_i32_1 = arith.constant 0 : i32
    return %c0_i32, %c0_i32_0 : i32, i32
  }
  func.func @transform_3(%arg0: i32, %arg1: i32) -> (i32, i32) {
    %c0_i32 = arith.constant 0 : i32
    %c0_i32_0 = arith.constant 0 : i32
    return %arg0, %c0_i32 : i32, i32
  }
  func.func @transform_4(%arg0: i32, %arg1: i32) -> (i32, i32) {
    %c0_i32 = arith.constant 0 : i32
    %c0_i32_0 = arith.constant 0 : i32
    %c0_i32_1 = arith.constant 0 : i32
    return %c0_i32, %c0_i32_0 : i32, i32
  }
  func.func @transform_5(%arg0: i32, %arg1: i32) -> (i32, i32) {
    %c0_i32 = arith.constant 0 : i32
    %c0_i32_0 = arith.constant 0 : i32
    %c0_i32_1 = arith.constant 0 : i32
    return %c0_i32, %c0_i32_0 : i32, i32
  }
  func.func @transform_6(%arg0: i32, %arg1: i32) -> (i32, i32) {
    %c0_i32 = arith.constant 0 : i32
    %c0_i32_0 = arith.constant 0 : i32
    return %arg0, %c0_i32 : i32, i32
  }
}

module attributes {stable_mosaic.version = 11 : i64} {
  func.func @_attn_kernel(%arg0: i32, %arg1: i32, %arg2: memref<1x8x32xf32, #tpu.memory_space<vmem>>, %arg3: memref<1x8x32xf32, #tpu.memory_space<vmem>>, %arg4: memref<1x8x32xf32, #tpu.memory_space<vmem>>, %arg5: memref<1x8x8xf32, #tpu.memory_space<vmem>>, %arg6: memref<1x8x32xf32, #tpu.memory_space<vmem>>) attributes {dimension_semantics = [#tpu.dimension_semantics<parallel>, #tpu.dimension_semantics<parallel>], iteration_bounds = array<i64: 2, 1>, scalar_prefetch = 0 : i64, scratch_operands = 0 : i64, tpu.core_type = #tpu.core_type<tc>, window_params = [{transform_indices = @transform_0, window_bounds = array<i64: 1, 8, 32>}, {transform_indices = @transform_1, window_bounds = array<i64: 1, 8, 32>}, {transform_indices = @transform_2, window_bounds = array<i64: 1, 8, 32>}, {transform_indices = @transform_3, window_bounds = array<i64: 1, 8, 8>}, {transform_indices = @transform_4, window_bounds = array<i64: 1, 8, 32>}]} {
    %c0 = arith.constant 0 : index
    %c0_0 = arith.constant 0 : index
    %c0_1 = arith.constant 0 : index
    %0 = vector.load %arg2[%c0, %c0_0, %c0_1] : memref<1x8x32xf32, #tpu.memory_space<vmem>>, vector<1x8x32xf32>
    %1 = vector.shape_cast %0 : vector<1x8x32xf32> to vector<8x32xf32>
    %c0_2 = arith.constant 0 : index
    %c0_3 = arith.constant 0 : index
    %c0_4 = arith.constant 0 : index
    %2 = vector.load %arg3[%c0_2, %c0_3, %c0_4] : memref<1x8x32xf32, #tpu.memory_space<vmem>>, vector<1x8x32xf32>
    %3 = vector.shape_cast %2 : vector<1x8x32xf32> to vector<8x32xf32>
    %c0_5 = arith.constant 0 : index
    %c0_6 = arith.constant 0 : index
    %c0_7 = arith.constant 0 : index
    %4 = vector.load %arg4[%c0_5, %c0_6, %c0_7] : memref<1x8x32xf32, #tpu.memory_space<vmem>>, vector<1x8x32xf32>
    %5 = vector.shape_cast %4 : vector<1x8x32xf32> to vector<8x32xf32>
    %c0_8 = arith.constant 0 : index
    %c0_9 = arith.constant 0 : index
    %c0_10 = arith.constant 0 : index
    %6 = vector.load %arg5[%c0_8, %c0_9, %c0_10] : memref<1x8x8xf32, #tpu.memory_space<vmem>>, vector<1x8x8xf32>
    %7 = vector.shape_cast %6 : vector<1x8x8xf32> to vector<8x8xf32>
    %8 = vector.extract_strided_slice %1 {offsets = [0, 0], sizes = [8, 8], strides = [1, 1]} : vector<8x32xf32> to vector<8x8xf32>
    %9 = arith.truncf %8 : vector<8x8xf32> to vector<8x8xbf16>
    %10 = vector.extract_strided_slice %3 {offsets = [0, 0], sizes = [8, 8], strides = [1, 1]} : vector<8x32xf32> to vector<8x8xf32>
    %11 = arith.truncf %10 : vector<8x8xf32> to vector<8x8xbf16>
    %12 = vector.extract_strided_slice %5 {offsets = [0, 0], sizes = [8, 8], strides = [1, 1]} : vector<8x32xf32> to vector<8x8xf32>
    %13 = arith.truncf %12 : vector<8x8xf32> to vector<8x8xbf16>
    "tpu.trace_start"() <{level = 10 : i32, message = "qd,kd->qk"}> : () -> ()
    %cst = arith.constant dense<0.000000e+00> : vector<8x8xf32>
    %14 = tpu.matmul %9, %11, %cst {dimension_numbers = #tpu.dot_dimension_numbers<[1], [1], [0], [0], [0, 0, 1, 0], [], []>} : vector<8x8xbf16>, vector<8x8xbf16>, vector<8x8xf32> -> vector<8x8xf32>
    "tpu.trace_stop"() : () -> ()
    %cst_11 = arith.constant 0.353553385 : f32
    %15 = vector.broadcast %cst_11 : f32 to vector<8x8xf32>
    %16 = arith.mulf %14, %15 : vector<8x8xf32>
    %17 = arith.addf %16, %7 : vector<8x8xf32>
    %cst_12 = arith.constant dense<0xFF800000> : vector<8xf32>
    %18 = vector.multi_reduction <maximumf>, %17, %cst_12 [1] : vector<8x8xf32> to vector<8xf32>
    %19 = vector.shape_cast %18 : vector<8xf32> to vector<8x1xf32>
    %20 = vector.broadcast %19 : vector<8x1xf32> to vector<8x8xf32>
    %21 = arith.subf %17, %20 : vector<8x8xf32>
    %22 = math.exp %21 : vector<8x8xf32>
    %cst_13 = arith.constant dense<0.000000e+00> : vector<8xf32>
    %23 = vector.multi_reduction <add>, %22, %cst_13 [1] : vector<8x8xf32> to vector<8xf32>
    %24 = vector.shape_cast %23 : vector<8xf32> to vector<8x1xf32>
    %25 = tpu.reciprocal %24 {approx = true} : vector<8x1xf32> -> vector<8x1xf32>
    %26 = vector.broadcast %25 : vector<8x1xf32> to vector<8x8xf32>
    %27 = arith.mulf %22, %26 : vector<8x8xf32>
    %28 = arith.truncf %27 : vector<8x8xf32> to vector<8x8xbf16>
    %cst_14 = arith.constant dense<0.000000e+00> : vector<8x8xf32>
    %29 = tpu.matmul %28, %13, %cst_14 {dimension_numbers = #tpu.dot_dimension_numbers<[1], [0], [0], [1], [0, 0, 1, 1], [], []>} : vector<8x8xbf16>, vector<8x8xbf16>, vector<8x8xf32> -> vector<8x8xf32>
    %30 = vector.extract_strided_slice %1 {offsets = [0, 8], sizes = [8, 8], strides = [1, 1]} : vector<8x32xf32> to vector<8x8xf32>
    %31 = arith.truncf %30 : vector<8x8xf32> to vector<8x8xbf16>
    %32 = vector.extract_strided_slice %3 {offsets = [0, 8], sizes = [8, 8], strides = [1, 1]} : vector<8x32xf32> to vector<8x8xf32>
    %33 = arith.truncf %32 : vector<8x8xf32> to vector<8x8xbf16>
    %34 = vector.extract_strided_slice %5 {offsets = [0, 8], sizes = [8, 8], strides = [1, 1]} : vector<8x32xf32> to vector<8x8xf32>
    %35 = arith.truncf %34 : vector<8x8xf32> to vector<8x8xbf16>
    "tpu.trace_start"() <{level = 10 : i32, message = "qd,kd->qk"}> : () -> ()
    %cst_15 = arith.constant dense<0.000000e+00> : vector<8x8xf32>
    %36 = tpu.matmul %31, %33, %cst_15 {dimension_numbers = #tpu.dot_dimension_numbers<[1], [1], [0], [0], [0, 0, 1, 0], [], []>} : vector<8x8xbf16>, vector<8x8xbf16>, vector<8x8xf32> -> vector<8x8xf32>
    "tpu.trace_stop"() : () -> ()
    %cst_16 = arith.constant 0.353553385 : f32
    %37 = vector.broadcast %cst_16 : f32 to vector<8x8xf32>
    %38 = arith.mulf %36, %37 : vector<8x8xf32>
    %39 = arith.addf %38, %7 : vector<8x8xf32>
    %cst_17 = arith.constant dense<0xFF800000> : vector<8xf32>
    %40 = vector.multi_reduction <maximumf>, %39, %cst_17 [1] : vector<8x8xf32> to vector<8xf32>
    %41 = vector.shape_cast %40 : vector<8xf32> to vector<8x1xf32>
    %42 = vector.broadcast %41 : vector<8x1xf32> to vector<8x8xf32>
    %43 = arith.subf %39, %42 : vector<8x8xf32>
    %44 = math.exp %43 : vector<8x8xf32>
    %cst_18 = arith.constant dense<0.000000e+00> : vector<8xf32>
    %45 = vector.multi_reduction <add>, %44, %cst_18 [1] : vector<8x8xf32> to vector<8xf32>
    %46 = vector.shape_cast %45 : vector<8xf32> to vector<8x1xf32>
    %47 = tpu.reciprocal %46 {approx = true} : vector<8x1xf32> -> vector<8x1xf32>
    %48 = vector.broadcast %47 : vector<8x1xf32> to vector<8x8xf32>
    %49 = arith.mulf %44, %48 : vector<8x8xf32>
    %50 = arith.truncf %49 : vector<8x8xf32> to vector<8x8xbf16>
    %cst_19 = arith.constant dense<0.000000e+00> : vector<8x8xf32>
    %51 = tpu.matmul %50, %35, %cst_19 {dimension_numbers = #tpu.dot_dimension_numbers<[1], [0], [0], [1], [0, 0, 1, 1], [], []>} : vector<8x8xbf16>, vector<8x8xbf16>, vector<8x8xf32> -> vector<8x8xf32>
    %52 = vector.extract_strided_slice %1 {offsets = [0, 16], sizes = [8, 8], strides = [1, 1]} : vector<8x32xf32> to vector<8x8xf32>
    %53 = arith.truncf %52 : vector<8x8xf32> to vector<8x8xbf16>
    %54 = vector.extract_strided_slice %3 {offsets = [0, 16], sizes = [8, 8], strides = [1, 1]} : vector<8x32xf32> to vector<8x8xf32>
    %55 = arith.truncf %54 : vector<8x8xf32> to vector<8x8xbf16>
    %56 = vector.extract_strided_slice %5 {offsets = [0, 16], sizes = [8, 8], strides = [1, 1]} : vector<8x32xf32> to vector<8x8xf32>
    %57 = arith.truncf %56 : vector<8x8xf32> to vector<8x8xbf16>
    "tpu.trace_start"() <{level = 10 : i32, message = "qd,kd->qk"}> : () -> ()
    %cst_20 = arith.constant dense<0.000000e+00> : vector<8x8xf32>
    %58 = tpu.matmul %53, %55, %cst_20 {dimension_numbers = #tpu.dot_dimension_numbers<[1], [1], [0], [0], [0, 0, 1, 0], [], []>} : vector<8x8xbf16>, vector<8x8xbf16>, vector<8x8xf32> -> vector<8x8xf32>
    "tpu.trace_stop"() : () -> ()
    %cst_21 = arith.constant 0.353553385 : f32
    %59 = vector.broadcast %cst_21 : f32 to vector<8x8xf32>
    %60 = arith.mulf %58, %59 : vector<8x8xf32>
    %61 = arith.addf %60, %7 : vector<8x8xf32>
    %cst_22 = arith.constant dense<0xFF800000> : vector<8xf32>
    %62 = vector.multi_reduction <maximumf>, %61, %cst_22 [1] : vector<8x8xf32> to vector<8xf32>
    %63 = vector.shape_cast %62 : vector<8xf32> to vector<8x1xf32>
    %64 = vector.broadcast %63 : vector<8x1xf32> to vector<8x8xf32>
    %65 = arith.subf %61, %64 : vector<8x8xf32>
    %66 = math.exp %65 : vector<8x8xf32>
    %cst_23 = arith.constant dense<0.000000e+00> : vector<8xf32>
    %67 = vector.multi_reduction <add>, %66, %cst_23 [1] : vector<8x8xf32> to vector<8xf32>
    %68 = vector.shape_cast %67 : vector<8xf32> to vector<8x1xf32>
    %69 = tpu.reciprocal %68 {approx = true} : vector<8x1xf32> -> vector<8x1xf32>
    %70 = vector.broadcast %69 : vector<8x1xf32> to vector<8x8xf32>
    %71 = arith.mulf %66, %70 : vector<8x8xf32>
    %72 = arith.truncf %71 : vector<8x8xf32> to vector<8x8xbf16>
    %cst_24 = arith.constant dense<0.000000e+00> : vector<8x8xf32>
    %73 = tpu.matmul %72, %57, %cst_24 {dimension_numbers = #tpu.dot_dimension_numbers<[1], [0], [0], [1], [0, 0, 1, 1], [], []>} : vector<8x8xbf16>, vector<8x8xbf16>, vector<8x8xf32> -> vector<8x8xf32>
    %74 = vector.extract_strided_slice %1 {offsets = [0, 24], sizes = [8, 8], strides = [1, 1]} : vector<8x32xf32> to vector<8x8xf32>
    %75 = arith.truncf %74 : vector<8x8xf32> to vector<8x8xbf16>
    %76 = vector.extract_strided_slice %3 {offsets = [0, 24], sizes = [8, 8], strides = [1, 1]} : vector<8x32xf32> to vector<8x8xf32>
    %77 = arith.truncf %76 : vector<8x8xf32> to vector<8x8xbf16>
    %78 = vector.extract_strided_slice %5 {offsets = [0, 24], sizes = [8, 8], strides = [1, 1]} : vector<8x32xf32> to vector<8x8xf32>
    %79 = arith.truncf %78 : vector<8x8xf32> to vector<8x8xbf16>
    "tpu.trace_start"() <{level = 10 : i32, message = "qd,kd->qk"}> : () -> ()
    %cst_25 = arith.constant dense<0.000000e+00> : vector<8x8xf32>
    %80 = tpu.matmul %75, %77, %cst_25 {dimension_numbers = #tpu.dot_dimension_numbers<[1], [1], [0], [0], [0, 0, 1, 0], [], []>} : vector<8x8xbf16>, vector<8x8xbf16>, vector<8x8xf32> -> vector<8x8xf32>
    "tpu.trace_stop"() : () -> ()
    %cst_26 = arith.constant 0.353553385 : f32
    %81 = vector.broadcast %cst_26 : f32 to vector<8x8xf32>
    %82 = arith.mulf %80, %81 : vector<8x8xf32>
    %83 = arith.addf %82, %7 : vector<8x8xf32>
    %cst_27 = arith.constant dense<0xFF800000> : vector<8xf32>
    %84 = vector.multi_reduction <maximumf>, %83, %cst_27 [1] : vector<8x8xf32> to vector<8xf32>
    %85 = vector.shape_cast %84 : vector<8xf32> to vector<8x1xf32>
    %86 = vector.broadcast %85 : vector<8x1xf32> to vector<8x8xf32>
    %87 = arith.subf %83, %86 : vector<8x8xf32>
    %88 = math.exp %87 : vector<8x8xf32>
    %cst_28 = arith.constant dense<0.000000e+00> : vector<8xf32>
    %89 = vector.multi_reduction <add>, %88, %cst_28 [1] : vector<8x8xf32> to vector<8xf32>
    %90 = vector.shape_cast %89 : vector<8xf32> to vector<8x1xf32>
    %91 = tpu.reciprocal %90 {approx = true} : vector<8x1xf32> -> vector<8x1xf32>
    %92 = vector.broadcast %91 : vector<8x1xf32> to vector<8x8xf32>
    %93 = arith.mulf %88, %92 : vector<8x8xf32>
    %94 = arith.truncf %93 : vector<8x8xf32> to vector<8x8xbf16>
    %cst_29 = arith.constant dense<0.000000e+00> : vector<8x8xf32>
    %95 = tpu.matmul %94, %79, %cst_29 {dimension_numbers = #tpu.dot_dimension_numbers<[1], [0], [0], [1], [0, 0, 1, 1], [], []>} : vector<8x8xbf16>, vector<8x8xbf16>, vector<8x8xf32> -> vector<8x8xf32>
    %96 = tpu.concatenate %29, %51, %73, %95 in 1 : vector<8x8xf32>, vector<8x8xf32>, vector<8x8xf32>, vector<8x8xf32> -> vector<8x32xf32>
    %c0_30 = arith.constant 0 : index
    %c0_31 = arith.constant 0 : index
    %c0_32 = arith.constant 0 : index
    %97 = vector.load %arg6[%c0_30, %c0_31, %c0_32] : memref<1x8x32xf32, #tpu.memory_space<vmem>>, vector<1x8x32xf32>
    %98 = vector.shape_cast %97 : vector<1x8x32xf32> to vector<8x32xf32>
    %99 = vector.shape_cast %96 : vector<8x32xf32> to vector<1x8x32xf32>
    tpu.vector_store %arg6[%c0_30, %c0_31, %c0_32], %99 {strides = array<i32>} : memref<1x8x32xf32, #tpu.memory_space<vmem>>, vector<1x8x32xf32>,
    return
  }
  func.func @transform_0(%arg0: i32, %arg1: i32) -> (i32, i32, i32) {
    %c0_i32 = arith.constant 0 : i32
    %c0_i32_0 = arith.constant 0 : i32
    return %arg0, %arg1, %c0_i32 : i32, i32, i32
  }
  func.func @transform_1(%arg0: i32, %arg1: i32) -> (i32, i32, i32) {
    %c0_i32 = arith.constant 0 : i32
    %c0_i32_0 = arith.constant 0 : i32
    %c0_i32_1 = arith.constant 0 : i32
    return %arg0, %c0_i32, %c0_i32_0 : i32, i32, i32
  }
  func.func @transform_2(%arg0: i32, %arg1: i32) -> (i32, i32, i32) {
    %c0_i32 = arith.constant 0 : i32
    %c0_i32_0 = arith.constant 0 : i32
    %c0_i32_1 = arith.constant 0 : i32
    return %arg0, %c0_i32, %c0_i32_0 : i32, i32, i32
  }
  func.func @transform_3(%arg0: i32, %arg1: i32) -> (i32, i32, i32) {
    %c0_i32 = arith.constant 0 : i32
    %c0_i32_0 = arith.constant 0 : i32
    return %arg0, %arg1, %c0_i32 : i32, i32, i32
  }
  func.func @transform_4(%arg0: i32, %arg1: i32) -> (i32, i32, i32) {
    %c0_i32 = arith.constant 0 : i32
    %c0_i32_0 = arith.constant 0 : i32
    return %arg0, %arg1, %c0_i32 : i32, i32, i32
  }
}

module attributes {stable_mosaic.version = 11 : i64} {
  func.func @_ffn_add_ln_kernel(%arg0: i32, %arg1: memref<16x128xf32, #tpu.memory_space<vmem>>, %arg2: memref<128x128xbf16, #tpu.memory_space<vmem>>, %arg3: memref<1x128xf32, #tpu.memory_space<vmem>>, %arg4: memref<128x128xbf16, #tpu.memory_space<vmem>>, %arg5: memref<1x128xf32, #tpu.memory_space<vmem>>, %arg6: memref<1x128xf32, #tpu.memory_space<vmem>>, %arg7: memref<1x128xf32, #tpu.memory_space<vmem>>, %arg8: memref<16x128xf32, #tpu.memory_space<vmem>>) attributes {dimension_semantics = [#tpu.dimension_semantics<parallel>], iteration_bounds = array<i64: 1>, scalar_prefetch = 0 : i64, scratch_operands = 0 : i64, tpu.core_type = #tpu.core_type<tc>, window_params = [{transform_indices = @transform_0, window_bounds = array<i64: 16, 128>}, {pipeline_mode = #tpu.pipeline_mode<synchronous>, transform_indices = @transform_1, window_bounds = array<i64: 128, 128>}, {pipeline_mode = #tpu.pipeline_mode<synchronous>, transform_indices = @transform_2, window_bounds = array<i64: 1, 128>}, {pipeline_mode = #tpu.pipeline_mode<synchronous>, transform_indices = @transform_3, window_bounds = array<i64: 128, 128>}, {pipeline_mode = #tpu.pipeline_mode<synchronous>, transform_indices = @transform_4, window_bounds = array<i64: 1, 128>}, {pipeline_mode = #tpu.pipeline_mode<synchronous>, transform_indices = @transform_5, window_bounds = array<i64: 1, 128>}, {pipeline_mode = #tpu.pipeline_mode<synchronous>, transform_indices = @transform_6, window_bounds = array<i64: 1, 128>}, {transform_indices = @transform_7, window_bounds = array<i64: 16, 128>}]} {
    %c0 = arith.constant 0 : index
    %c0_0 = arith.constant 0 : index
    %0 = vector.load %arg1[%c0, %c0_0] : memref<16x128xf32, #tpu.memory_space<vmem>>, vector<16x128xf32>
    %1 = arith.truncf %0 : vector<16x128xf32> to vector<16x128xbf16>
    %c0_1 = arith.constant 0 : index
    %c0_2 = arith.constant 0 : index
    %2 = vector.load %arg2[%c0_1, %c0_2] : memref<128x128xbf16, #tpu.memory_space<vmem>>, vector<128x128xbf16>
    %cst = arith.constant dense<0.000000e+00> : vector<16x128xf32>
    %3 = tpu.matmul %1, %2, %cst {dimension_numbers = #tpu.dot_dimension_numbers<[1], [0], [0], [1], [0, 0, 1, 1], [], []>} : vector<16x128xbf16>, vector<128x128xbf16>, vector<16x128xf32> -> vector<16x128xf32>
    %c0_3 = arith.constant 0 : index
    %c0_4 = arith.constant 0 : index
    %4 = vector.load %arg3[%c0_3, %c0_4] : memref<1x128xf32, #tpu.memory_space<vmem>>, vector<1x128xf32>
    %5 = vector.broadcast %4 : vector<1x128xf32> to vector<16x128xf32>
    %6 = arith.addf %3, %5 : vector<16x128xf32>
    %cst_5 = arith.constant 0.000000e+00 : f32
    %7 = vector.broadcast %cst_5 : f32 to vector<16x128xf32>
    %8 = arith.maximumf %6, %7 : vector<16x128xf32>
    %9 = arith.truncf %8 : vector<16x128xf32> to vector<16x128xbf16>
    %c0_6 = arith.constant 0 : index
    %c0_7 = arith.constant 0 : index
    %10 = vector.load %arg4[%c0_6, %c0_7] : memref<128x128xbf16, #tpu.memory_space<vmem>>, vector<128x128xbf16>
    %cst_8 = arith.constant dense<0.000000e+00> : vector<16x128xf32>
    %11 = tpu.matmul %9, %10, %cst_8 {dimension_numbers = #tpu.dot_dimension_numbers<[1], [0], [0], [1], [0, 0, 1, 1], [], []>} : vector<16x128xbf16>, vector<128x128xbf16>, vector<16x128xf32> -> vector<16x128xf32>
    %c0_9 = arith.constant 0 : index
    %c0_10 = arith.constant 0 : index
    %12 = vector.load %arg5[%c0_9, %c0_10] : memref<1x128xf32, #tpu.memory_space<vmem>>, vector<1x128xf32>
    %13 = vector.broadcast %12 : vector<1x128xf32> to vector<16x128xf32>
    %14 = arith.addf %11, %13 : vector<16x128xf32>
    %15 = arith.addf %14, %0 : vector<16x128xf32>
    %c0_11 = arith.constant 0 : index
    %c0_12 = arith.constant 0 : index
    %16 = vector.load %arg6[%c0_11, %c0_12] : memref<1x128xf32, #tpu.memory_space<vmem>>, vector<1x128xf32>
    %c0_13 = arith.constant 0 : index
    %c0_14 = arith.constant 0 : index
    %17 = vector.load %arg7[%c0_13, %c0_14] : memref<1x128xf32, #tpu.memory_space<vmem>>, vector<1x128xf32>
    %cst_15 = arith.constant dense<0.000000e+00> : vector<16xf32>
    %18 = vector.multi_reduction <add>, %15, %cst_15 [1] : vector<16x128xf32> to vector<16xf32>
    %19 = vector.shape_cast %18 : vector<16xf32> to vector<16x1xf32>
    %cst_16 = arith.constant 3.125000e-02 : f32
    %20 = vector.broadcast %cst_16 : f32 to vector<16x1xf32>
    %21 = arith.mulf %19, %20 : vector<16x1xf32>
    %22 = arith.mulf %15, %15 : vector<16x128xf32>
    %cst_17 = arith.constant dense<0.000000e+00> : vector<16xf32>
    %23 = vector.multi_reduction <add>, %22, %cst_17 [1] : vector<16x128xf32> to vector<16xf32>
    %24 = vector.shape_cast %23 : vector<16xf32> to vector<16x1xf32>
    %cst_18 = arith.constant 3.125000e-02 : f32
    %25 = vector.broadcast %cst_18 : f32 to vector<16x1xf32>
    %26 = arith.mulf %24, %25 : vector<16x1xf32>
    %27 = arith.mulf %21, %21 : vector<16x1xf32>
    %28 = arith.subf %26, %27 : vector<16x1xf32>
    %29 = vector.broadcast %21 : vector<16x1xf32> to vector<16x128xf32>
    %30 = arith.subf %15, %29 : vector<16x128xf32>
    %cst_19 = arith.constant 9.99999996E-13 : f32
    %31 = vector.broadcast %cst_19 : f32 to vector<16x1xf32>
    %32 = arith.addf %28, %31 : vector<16x1xf32>
    %33 = math.rsqrt %32 : vector<16x1xf32>
    %34 = vector.broadcast %33 : vector<16x1xf32> to vector<16x128xf32>
    %35 = arith.mulf %30, %34 : vector<16x128xf32>
    %36 = vector.broadcast %16 : vector<1x128xf32> to vector<16x128xf32>
    %37 = arith.mulf %36, %35 : vector<16x128xf32>
    %38 = vector.broadcast %17 : vector<1x128xf32> to vector<16x128xf32>
    %39 = arith.addf %37, %38 : vector<16x128xf32>
    %c0_20 = arith.constant 0 : index
    %c0_21 = arith.constant 0 : index
    %40 = vector.load %arg8[%c0_20, %c0_21] : memref<16x128xf32, #tpu.memory_space<vmem>>, vector<16x128xf32>
    tpu.vector_store %arg8[%c0_20, %c0_21], %39 {strides = array<i32>} : memref<16x128xf32, #tpu.memory_space<vmem>>, vector<16x128xf32>,
    return
  }
  func.func @transform_0(%arg0: i32) -> (i32, i32) {
    %c0_i32 = arith.constant 0 : i32
    %c0_i32_0 = arith.constant 0 : i32
    return %arg0, %c0_i32 : i32, i32
  }
  func.func @transform_1(%arg0: i32) -> (i32, i32) {
    %c0_i32 = arith.constant 0 : i32
    %c0_i32_0 = arith.constant 0 : i32
    %c0_i32_1 = arith.constant 0 : i32
    return %c0_i32, %c0_i32_0 : i32, i32
  }
  func.func @transform_2(%arg0: i32) -> (i32, i32) {
    %c0_i32 = arith.constant 0 : i32
    %c0_i32_0 = arith.constant 0 : i32
    %c0_i32_1 = arith.constant 0 : i32
    return %c0_i32, %c0_i32_0 : i32, i32
  }
  func.func @transform_3(%arg0: i32) -> (i32, i32) {
    %c0_i32 = arith.constant 0 : i32
    %c0_i32_0 = arith.constant 0 : i32
    %c0_i32_1 = arith.constant 0 : i32
    return %c0_i32, %c0_i32_0 : i32, i32
  }
  func.func @transform_4(%arg0: i32) -> (i32, i32) {
    %c0_i32 = arith.constant 0 : i32
    %c0_i32_0 = arith.constant 0 : i32
    %c0_i32_1 = arith.constant 0 : i32
    return %c0_i32, %c0_i32_0 : i32, i32
  }
  func.func @transform_5(%arg0: i32) -> (i32, i32) {
    %c0_i32 = arith.constant 0 : i32
    %c0_i32_0 = arith.constant 0 : i32
    %c0_i32_1 = arith.constant 0 : i32
    return %c0_i32, %c0_i32_0 : i32, i32
  }
  func.func @transform_6(%arg0: i32) -> (i32, i32) {
    %c0_i32 = arith.constant 0 : i32
    %c0_i32_0 = arith.constant 0 : i32
    %c0_i32_1 = arith.constant 0 : i32
    return %c0_i32, %c0_i32_0 : i32, i32
  }
  func.func @transform_7(%arg0: i32) -> (i32, i32) {
    %c0_i32 = arith.constant 0 : i32
    %c0_i32_0 = arith.constant 0 : i32
    return %arg0, %c0_i32 : i32, i32
  }
}

</mosaic_0001>

<llo_original>
// kernel: decoder_forward.19
$region0: #{decoder_forward.19}
  #allocation0 [shape = 'u32[]', space=smem, size = 0x4, offset = 0x4, fixed_abs, tag = 'smem constant byte address 0x4 - core index']
  #allocation1 [shape = 'u32[72,128]{1,0:T(1,128)}', space=vmem, size = 0x9000, scoped, tag = 'internal scratch']
  #allocation2 [shape = 'f32[16,128]{1,0:T(8,128)}', space=vmem, size = 0x2000, scoped, tag = 'scratch operand']
  %s0 = inlined_call_operand.vmem [shape: f32[16,128], index: 0, kind: input, shape index: {}]
  %s1 = inlined_call_operand.vmem [shape: bf16[128,128], index: 1, kind: input, shape index: {}]
  %s2 = inlined_call_operand.vmem [shape: f32[1,128], index: 2, kind: input, shape index: {}]
  %s3 = inlined_call_operand.vmem [shape: f32[16,128], index: 3, kind: output, shape index: {}]
  %s4 = sld [smem:[#allocation0]]
  $region30: #{decoder_forward.19} parent=0
    _
  %s6 = ssub.s32 1, %s4
  %s7 = scalar_select 0, %s6, %s4
  // Predicated region
  $region2: #{decoder_forward.19} parent=0 // pred_check
    _
  $region3: #{decoder_forward.19} parent=0 // pred_check_branch
    %9 = sbr.rel (0) target = $region5
  $region4: #{decoder_forward.19} parent=0 // pred_region
    _
  $region5: #{decoder_forward.19} parent=0 // pred_fallthru
    _
  // Predicated region
  $region6: #{decoder_forward.19} parent=0 // pred_check
    _
  $region7: #{decoder_forward.19} parent=0 // pred_check_branch
    %11 = sbr.rel (0) target = $region9
  $region8: #{decoder_forward.19} parent=0 // pred_region
    _
  $region9: #{decoder_forward.19} parent=0 // pred_fallthru
    _
  // Predicated region
  $region10: #{decoder_forward.19} parent=0 // pred_check
    _
  $region11: #{decoder_forward.19} parent=0 // pred_check_branch
    %13 = sbr.rel (0) target = $region13
  $region12: #{decoder_forward.19} parent=0 // pred_region
    _
  $region13: #{decoder_forward.19} parent=0 // pred_fallthru
    _
  %p14 = scmp.eq.s32.totalorder 0, 0
  // Predicated region
  $region14: #{decoder_forward.19} parent=0 // pred_check
    %p15 = pneg %p14
  $region15: #{decoder_forward.19} parent=0 // pred_check_branch
    %17 = sbr.rel (%p15) target = $region17
  $region16: #{decoder_forward.19} parent=0 // pred_region
    %18 = vst [vmem:[#allocation2] sm:$0xff] 0.0
    %19 = vst [vmem:[#allocation2 + $0x8] sm:$0xff] 0.0
  $region17: #{decoder_forward.19} parent=0 // pred_fallthru
    _
  %v20 = vld [vmem:[#allocation2] sm:$0xff]
  %v21 = vld [vmem:[#allocation2 + $0x8] sm:$0xff]
  %v22 = vld [vmem:[%s0] sm:$0xff]
  %v23 = vld [vmem:[%s0 + $0x8] sm:$0xff]
  %v24 = vpack.c.bf16 %v23, %v22
  %v25 = vld [vmem:[%s1] sm:$0xf]
  %v26 = vld [vmem:[%s1 + $0x4] sm:$0xf]
  %v27 = vld [vmem:[%s1 + $0x8] sm:$0xf]
  %v28 = vld [vmem:[%s1 + $0xc] sm:$0xf]
  %v29 = vld [vmem:[%s1 + $0x10] sm:$0xf]
  %v30 = vld [vmem:[%s1 + $0x14] sm:$0xf]
  %v31 = vld [vmem:[%s1 + $0x18] sm:$0xf]
  %v32 = vld [vmem:[%s1 + $0x1c] sm:$0xf]
  %v33 = vld [vmem:[%s1 + $0x20] sm:$0xf]
  %v34 = vld [vmem:[%s1 + $0x24] sm:$0xf]
  %v35 = vld [vmem:[%s1 + $0x28] sm:$0xf]
  %v36 = vld [vmem:[%s1 + $0x2c] sm:$0xf]
  %v37 = vld [vmem:[%s1 + $0x30] sm:$0xf]
  %v38 = vld [vmem:[%s1 + $0x34] sm:$0xf]
  %v39 = vld [vmem:[%s1 + $0x38] sm:$0xf]
  %v40 = vld [vmem:[%s1 + $0x3c] sm:$0xf]
  %v57 = vunpack.c.l.b16 %v25
  %v58 = vunpack.c.l.b16 %v26
  %v59 = vunpack.c.l.b16 %v27
  %v60 = vunpack.c.l.b16 %v28
  %v61 = vunpack.c.l.b16 %v29
  %v62 = vunpack.c.l.b16 %v30
  %v63 = vunpack.c.l.b16 %v31
  %v64 = vunpack.c.l.b16 %v32
  %v65 = vunpack.c.l.b16 %v33
  %v66 = vunpack.c.l.b16 %v34
  %v67 = vunpack.c.l.b16 %v35
  %v68 = vunpack.c.l.b16 %v36
  %v69 = vunpack.c.l.b16 %v37
  %v70 = vunpack.c.l.b16 %v38
  %v71 = vunpack.c.l.b16 %v39
  %v72 = vunpack.c.l.b16 %v40
  %v73 = vpack.c.b16 %v58, %v57
  %v74 = vpack.c.b16 %v60, %v59
  %v75 = vpack.c.b16 %v62, %v61
  %v76 = vpack.c.b16 %v64, %v63
  %v77 = vpack.c.b16 %v66, %v65
  %v78 = vpack.c.b16 %v68, %v67
  %v79 = vpack.c.b16 %v70, %v69
  %v80 = vpack.c.b16 %v72, %v71
  %89 = vmatpush.bf16.msra.mxu0 %v80
  %90 = vmatpush.bf16.msra.mxu0 %v79
  %91 = vmatpush.bf16.msra.mxu0 %v78
  %92 = vmatpush.bf16.msra.mxu0 %v77
  %93 = vmatpush.bf16.msra.mxu0 %v76
  %94 = vmatpush.bf16.msra.mxu0 %v75
  %95 = vmatpush.bf16.msra.mxu0 %v74
  %96 = vmatpush.bf16.msra.mxu0 %v73
  %97 = vmatmul.bf16.gmra.mxu0 %v24
  %v98 = vpop.f32.mrf.mxu0
  %v99 = vadd.f32 0.0, %v98
  %v100 = vpop.f32.mrf.mxu0
  %v101 = vadd.f32 0.0, %v100
  %102 = vdwg.mxu0
  %v103 = vadd.f32 %v20, %v99
  %v104 = vadd.f32 %v21, %v101
  %105 = vst [vmem:[#allocation2] sm:$0xff] %v103
  %106 = vst [vmem:[#allocation2 + $0x8] sm:$0xff] %v104
  // Predicated region
  $region18: #{decoder_forward.19} parent=0 // pred_check
    %p107 = pneg %p14
  $region19: #{decoder_forward.19} parent=0 // pred_check_branch
    %109 = sbr.rel (%p107) target = $region21
  $region20: #{decoder_forward.19} parent=0 // pred_region
    %v110 = vld [vmem:[#allocation2] sm:$0xff]
    %v111 = vld [vmem:[#allocation2 + $0x8] sm:$0xff]
    %v112 = vld [vmem:[%s2] sm:$0x1]
    %v114 = vperm.slane %v112, 0
    %v116 = vadd.f32 %v110, %v114
    %v117 = vadd.f32 %v111, %v114
    %118 = vst [vmem:[%s3] sm:$0xff] %v116
    %119 = vst [vmem:[%s3 + $0x8] sm:$0xff] %v117
  $region21: #{decoder_forward.19} parent=0 // pred_fallthru
    _
  // Predicated region
  $region22: #{decoder_forward.19} parent=0 // pred_check
    _
  $region23: #{decoder_forward.19} parent=0 // pred_check_branch
    %121 = sbr.rel (0) target = $region25
  $region24: #{decoder_forward.19} parent=0 // pred_region
    _
  $region25: #{decoder_forward.19} parent=0 // pred_fallthru
    _
  // Predicated region
  $region26: #{decoder_forward.19} parent=0 // pred_check
    _
  $region27: #{decoder_forward.19} parent=0 // pred_check_branch
    %123 = sbr.rel (0) target = $region29
  $region28: #{decoder_forward.19} parent=0 // pred_region
    _
  $region29: #{decoder_forward.19} parent=0 // pred_fallthru
    _

// kernel: decoder_forward.21
$region0: #{decoder_forward.21}
  #allocation0 [shape = 'u32[]', space=smem, size = 0x4, offset = 0x4, fixed_abs, tag = 'smem constant byte address 0x4 - core index']
  #allocation1 [shape = 'u32[72,128]{1,0:T(1,128)}', space=vmem, size = 0x9000, scoped, tag = 'internal scratch']
  #allocation2 [shape = 'f32[16,128]{1,0:T(8,128)}', space=vmem, size = 0x2000, scoped, tag = 'scratch operand']
  %s0 = inlined_call_operand.vmem [shape: f32[16,128], index: 0, kind: input, shape index: {}]
  %s1 = inlined_call_operand.vmem [shape: bf16[128,128], index: 1, kind: input, shape index: {}]
  %s2 = inlined_call_operand.vmem [shape: f32[1,128], index: 2, kind: input, shape index: {}]
  %s3 = inlined_call_operand.vmem [shape: f32[16,128], index: 3, kind: input, shape index: {}]
  %s4 = inlined_call_operand.vmem [shape: f32[1,128], index: 4, kind: input, shape index: {}]
  %s5 = inlined_call_operand.vmem [shape: f32[1,128], index: 5, kind: input, shape index: {}]
  %s6 = inlined_call_operand.vmem [shape: f32[16,128], index: 6, kind: output, shape index: {}]
  %s7 = sld [smem:[#allocation0]]
  $region42: #{decoder_forward.21} parent=0
    _
  %s9 = ssub.s32 1, %s7
  %s10 = scalar_select 0, %s9, %s7
  // Predicated region
  $region2: #{decoder_forward.21} parent=0 // pred_check
    _
  $region3: #{decoder_forward.21} parent=0 // pred_check_branch
    %12 = sbr.rel (0) target = $region5
  $region4: #{decoder_forward.21} parent=0 // pred_region
    _
  $region5: #{decoder_forward.21} parent=0 // pred_fallthru
    _
  // Predicated region
  $region6: #{decoder_forward.21} parent=0 // pred_check
    _
  $region7: #{decoder_forward.21} parent=0 // pred_check_branch
    %14 = sbr.rel (0) target = $region9
  $region8: #{decoder_forward.21} parent=0 // pred_region
    _
  $region9: #{decoder_forward.21} parent=0 // pred_fallthru
    _
  // Predicated region
  $region10: #{decoder_forward.21} parent=0 // pred_check
    _
  $region11: #{decoder_forward.21} parent=0 // pred_check_branch
    %16 = sbr.rel (0) target = $region13
  $region12: #{decoder_forward.21} parent=0 // pred_region
    _
  $region13: #{decoder_forward.21} parent=0 // pred_fallthru
    _
  // Predicated region
  $region14: #{decoder_forward.21} parent=0 // pred_check
    _
  $region15: #{decoder_forward.21} parent=0 // pred_check_branch
    %18 = sbr.rel (0) target = $region17
  $region16: #{decoder_forward.21} parent=0 // pred_region
    _
  $region17: #{decoder_forward.21} parent=0 // pred_fallthru
    _
  // Predicated region
  $region18: #{decoder_forward.21} parent=0 // pred_check
    _
  $region19: #{decoder_forward.21} parent=0 // pred_check_branch
    %20 = sbr.rel (0) target = $region21
  $region20: #{decoder_forward.21} parent=0 // pred_region
    _
  $region21: #{decoder_forward.21} parent=0 // pred_fallthru
    _
  // Predicated region
  $region22: #{decoder_forward.21} parent=0 // pred_check
    _
  $region23: #{decoder_forward.21} parent=0 // pred_check_branch
    %22 = sbr.rel (0) target = $region25
  $region24: #{decoder_forward.21} parent=0 // pred_region
    _
  $region25: #{decoder_forward.21} parent=0 // pred_fallthru
    _
  %p23 = scmp.eq.s32.totalorder 0, 0
  // Predicated region
  $region26: #{decoder_forward.21} parent=0 // pred_check
    %p24 = pneg %p23
  $region27: #{decoder_forward.21} parent=0 // pred_check_branch
    %26 = sbr.rel (%p24) target = $region29
  $region28: #{decoder_forward.21} parent=0 // pred_region
    %27 = vst [vmem:[#allocation2] sm:$0xff] 0.0
    %28 = vst [vmem:[#allocation2 + $0x8] sm:$0xff] 0.0
  $region29: #{decoder_forward.21} parent=0 // pred_fallthru
    _
  %v29 = vld [vmem:[#allocation2] sm:$0xff]
  %v30 = vld [vmem:[#allocation2 + $0x8] sm:$0xff]
  %v31 = vld [vmem:[%s0] sm:$0xff]
  %v32 = vld [vmem:[%s0 + $0x8] sm:$0xff]
  %v33 = vpack.c.bf16 %v32, %v31
  %v34 = vld [vmem:[%s1] sm:$0xf]
  %v35 = vld [vmem:[%s1 + $0x4] sm:$0xf]
  %v36 = vld [vmem:[%s1 + $0x8] sm:$0xf]
  %v37 = vld [vmem:[%s1 + $0xc] sm:$0xf]
  %v38 = vld [vmem:[%s1 + $0x10] sm:$0xf]
  %v39 = vld [vmem:[%s1 + $0x14] sm:$0xf]
  %v40 = vld [vmem:[%s1 + $0x18] sm:$0xf]
  %v41 = vld [vmem:[%s1 + $0x1c] sm:$0xf]
  %v42 = vld [vmem:[%s1 + $0x20] sm:$0xf]
  %v43 = vld [vmem:[%s1 + $0x24] sm:$0xf]
  %v44 = vld [vmem:[%s1 + $0x28] sm:$0xf]
  %v45 = vld [vmem:[%s1 + $0x2c] sm:$0xf]
  %v46 = vld [vmem:[%s1 + $0x30] sm:$0xf]
  %v47 = vld [vmem:[%s1 + $0x34] sm:$0xf]
  %v48 = vld [vmem:[%s1 + $0x38] sm:$0xf]
  %v49 = vld [vmem:[%s1 + $0x3c] sm:$0xf]
  %v66 = vunpack.c.l.b16 %v34
  %v67 = vunpack.c.l.b16 %v35
  %v68 = vunpack.c.l.b16 %v36
  %v69 = vunpack.c.l.b16 %v37
  %v70 = vunpack.c.l.b16 %v38
  %v71 = vunpack.c.l.b16 %v39
  %v72 = vunpack.c.l.b16 %v40
  %v73 = vunpack.c.l.b16 %v41
  %v74 = vunpack.c.l.b16 %v42
  %v75 = vunpack.c.l.b16 %v43
  %v76 = vunpack.c.l.b16 %v44
  %v77 = vunpack.c.l.b16 %v45
  %v78 = vunpack.c.l.b16 %v46
  %v79 = vunpack.c.l.b16 %v47
  %v80 = vunpack.c.l.b16 %v48
  %v81 = vunpack.c.l.b16 %v49
  %v82 = vpack.c.b16 %v67, %v66
  %v83 = vpack.c.b16 %v69, %v68
  %v84 = vpack.c.b16 %v71, %v70
  %v85 = vpack.c.b16 %v73, %v72
  %v86 = vpack.c.b16 %v75, %v74
  %v87 = vpack.c.b16 %v77, %v76
  %v88 = vpack.c.b16 %v79, %v78
  %v89 = vpack.c.b16 %v81, %v80
  %98 = vmatpush.bf16.msra.mxu0 %v89
  %99 = vmatpush.bf16.msra.mxu0 %v88
  %100 = vmatpush.bf16.msra.mxu0 %v87
  %101 = vmatpush.bf16.msra.mxu0 %v86
  %102 = vmatpush.bf16.msra.mxu0 %v85
  %103 = vmatpush.bf16.msra.mxu0 %v84
  %104 = vmatpush.bf16.msra.mxu0 %v83
  %105 = vmatpush.bf16.msra.mxu0 %v82
  %106 = vmatmul.bf16.gmra.mxu0 %v33
  %v107 = vpop.f32.mrf.mxu0
  %v108 = vadd.f32 0.0, %v107
  %v109 = vpop.f32.mrf.mxu0
  %v110 = vadd.f32 0.0, %v109
  %111 = vdwg.mxu0
  %v112 = vadd.f32 %v29, %v108
  %v113 = vadd.f32 %v30, %v110
  %114 = vst [vmem:[#allocation2] sm:$0xff] %v112
  %115 = vst [vmem:[#allocation2 + $0x8] sm:$0xff] %v113
  // Predicated region
  $region30: #{decoder_forward.21} parent=0 // pred_check
    %p116 = pneg %p23
  $region31: #{decoder_forward.21} parent=0 // pred_check_branch
    %118 = sbr.rel (%p116) target = $region33
  $region32: #{decoder_forward.21} parent=0 // pred_region
    %v119 = vld [vmem:[#allocation2] sm:$0xff]
    %v120 = vld [vmem:[#allocation2 + $0x8] sm:$0xff]
    %v121 = vld [vmem:[%s2] sm:$0x1]
    %v123 = vperm.slane %v121, 0
    %v125 = vadd.f32 %v119, %v123
    %v126 = vadd.f32 %v120, %v123
    %v127 = vld [vmem:[%s3] sm:$0xff]
    %v128 = vld [vmem:[%s3 + $0x8] sm:$0xff]
    %v129 = vadd.f32 %v125, %v127
    %v130 = vadd.f32 %v126, %v128
    %v131 = vld [vmem:[%s4] sm:$0x1]
    %v132 = vld [vmem:[%s5] sm:$0x1]
    %133 = vadd.xlane.f32.xlu0 %v129
    %v134 = vpop.xlane.xlu0 %133
    %135 = vadd.xlane.f32.xlu0 %v130
    %v136 = vpop.xlane.xlu0 %135
    %v137 = vmul.f32 %v134, 0.03125
    %v138 = vmul.f32 %v136, 0.03125
    %v139 = vmul.f32 %v129, %v129
    %v140 = vmul.f32 %v130, %v130
    %141 = vadd.xlane.f32.xlu0 %v139
    %v142 = vpop.xlane.xlu0 %141
    %143 = vadd.xlane.f32.xlu0 %v140
    %v144 = vpop.xlane.xlu0 %143
    %v145 = vmul.f32 %v142, 0.03125
    %v146 = vmul.f32 %v144, 0.03125
    %v147 = vmul.f32 %v137, %v137
    %v148 = vmul.f32 %v138, %v138
    %v149 = vsub.f32 %v145, %v147
    %v150 = vsub.f32 %v146, %v148
    %v151 = vsub.f32 %v129, %v137
    %v152 = vsub.f32 %v130, %v138
    %v153 = vadd.f32 %v149, 1e-12
    %v154 = vadd.f32 %v150, 1e-12
    %v155 = vrsqrt.pop %v153
    %v156 = vmul.f32 %v155, %v153
    %v157 = vmul.f32 %v156, %v155
    %v158 = vmul.f32 0.5, %v157
    %v159 = vsub.f32 1.5, %v158
    %v160 = vmul.f32 %v155, %v159
    %vm161 = vweird.f32 %v153
    %vm162 = vweird.f32 %v155
    %vm163 = vmor %vm161, %vm162
    %v164 = vsel %vm163, %v155, %v160
    %v165 = vrsqrt.pop %v154
    %v166 = vmul.f32 %v165, %v154
    %v167 = vmul.f32 %v166, %v165
    %v168 = vmul.f32 0.5, %v167
    %v169 = vsub.f32 1.5, %v168
    %v170 = vmul.f32 %v165, %v169
    %vm171 = vweird.f32 %v154
    %vm172 = vweird.f32 %v165
    %vm173 = vmor %vm171, %vm172
    %v174 = vsel %vm173, %v165, %v170
    %v175 = vmul.f32 %v151, %v164
    %v176 = vmul.f32 %v152, %v174
    %v178 = vperm.slane %v131, 0
    %v180 = vmul.f32 %v178, %v175
    %v181 = vmul.f32 %v178, %v176
    %v183 = vperm.slane %v132, 0
    %v185 = vadd.f32 %v180, %v183
    %v186 = vadd.f32 %v181, %v183
    %187 = vst [vmem:[%s6] sm:$0xff] %v185
    %188 = vst [vmem:[%s6 + $0x8] sm:$0xff] %v186
  $region33: #{decoder_forward.21} parent=0 // pred_fallthru
    _
  // Predicated region
  $region34: #{decoder_forward.21} parent=0 // pred_check
    _
  $region35: #{decoder_forward.21} parent=0 // pred_check_branch
    %190 = sbr.rel (0) target = $region37
  $region36: #{decoder_forward.21} parent=0 // pred_region
    _
  $region37: #{decoder_forward.21} parent=0 // pred_fallthru
    _
  // Predicated region
  $region38: #{decoder_forward.21} parent=0 // pred_check
    _
  $region39: #{decoder_forward.21} parent=0 // pred_check_branch
    %192 = sbr.rel (0) target = $region41
  $region40: #{decoder_forward.21} parent=0 // pred_region
    _
  $region41: #{decoder_forward.21} parent=0 // pred_fallthru
    _

// kernel: decoder_forward.20
$region0: #{decoder_forward.20}
  #allocation0 [shape = 'u32[]', space=smem, size = 0x4, offset = 0x4, fixed_abs, tag = 'smem constant byte address 0x4 - core index']
  #allocation1 [shape = 'u32[72,128]{1,0:T(1,128)}', space=vmem, size = 0x9000, scoped, tag = 'internal scratch']
  %s0 = inlined_call_operand.vmem [shape: f32[2,8,32], index: 0, kind: input, shape index: {}]
  %s1 = inlined_call_operand.vmem [shape: f32[2,8,32], index: 1, kind: input, shape index: {}]
  %s2 = inlined_call_operand.vmem [shape: f32[2,8,32], index: 2, kind: input, shape index: {}]
  %s3 = inlined_call_operand.vmem [shape: f32[2,8,8], index: 3, kind: input, shape index: {}]
  %s4 = inlined_call_operand.vmem [shape: f32[2,8,32], index: 4, kind: output, shape index: {}]
  %s5 = sld [smem:[#allocation0]]
  $region49: #{decoder_forward.20} parent=0
    _
  %s7 = ssub.s32 1, %s5
  %s8 = scalar_select 0, %s7, %s5
  loop: start=0, step=1, limit=4
  $region2: #{decoder_forward.20} parent=0 // loop_pre_header
    _
  $region3: #{decoder_forward.20} parent=0 // loop_header
    %s10 = sphi 0, %s14
    %p11 = scmp.ge.s32.totalorder %s10, 4
    %s17 = sphi 0, %s29
    %s18 = sphi 0, %s25
    %s19 = sphi 0, %s17
    %s20 = sphi 0, %s18
    %s21 = sphi 0, %s19
    %s22 = sphi 0, %s20
    %s34 = sphi 0, %s36
    %s37 = sphi 0, %s34
    %s38 = sphi 0, %s37
    %s54 = sphi 0, %s38
    %s60 = sphi 0, %s62
    %s63 = sphi 0, %s60
    %s64 = sphi 0, %s63
    %s80 = sphi 0, %s64
    %s86 = sphi 0, %s88
    %s89 = sphi 0, %s86
    %s90 = sphi 0, %s89
    %s106 = sphi 0, %s90
    %s114 = sphi 0, %s116
    %s117 = sphi 0, %s114
    %s118 = sphi 0, %s117
    %s134 = sphi 0, %s118
    %s142 = sphi 0, %s144
    %s145 = sphi 0, %s142
    %s146 = sphi 0, %s145
    %s162 = sphi 0, %s146
  $region4: #{decoder_forward.20} parent=0 // loop_header_branch
    %13 = sbr.rel (%p11) target = $region8
  $region5: #{decoder_forward.20} parent=0 // loop_body
    %s15 = ssub.s32 %s10, 1
    %s16 = ssub.s32 %s10, 2
    %s23 = sadd.s32 1, %s18
    %p24 = scmp.ge.s32.totalorder %s23, 1
    %s25 = scalar_select %p24, 0, %s23
    %s26 = sadd.s32 1, %s17
    %s27 = scalar_select %p24, %s26, %s17
    %p28 = scmp.ge.s32.totalorder %s27, 2
    %s29 = scalar_select %p28, 0, %s27
    %s30 = ssub.s32 %s17, %s29
    %s31 = ssub.s32 %s18, %s25
    %s32 = sor.u32 %s30, %s31
    %p33 = scmp.eq.s32.totalorder %s32, 0
    %s35 = sadd.s32 %s34, 1
    %s36 = scalar_select %p33, %s34, %s35
    %p39 = pneg %p33
    %p40 = scmp.eq.s32.totalorder %s10, 1
    %p41 = por %p39, %p40
    %p42 = scmp.ne.s32.totalorder %s34, %s37
    %p43 = scmp.eq.s32.totalorder %s10, 0
    %p44 = por %p42, %p43
    %p45 = scmp.ne.s32.totalorder %s34, %s37
    %p46 = scmp.eq.s32.totalorder %s15, 1
    %p47 = por %p45, %p46
    %p48 = scmp.ne.s32.totalorder %s37, %s38
    %p49 = scmp.eq.s32.totalorder %s15, 0
    %p50 = por %p48, %p49
    %p51 = scmp.ne.s32.totalorder %s37, %s38
    %p52 = scmp.eq.s32.totalorder %s16, 1
    %p53 = por %p51, %p52
    %p55 = scmp.ne.s32.totalorder %s38, %s54
    %p56 = scmp.eq.s32.totalorder %s16, 0
    %p57 = por %p55, %p56
    %s58 = ssub.s32 %s17, %s29
    %p59 = scmp.eq.s32.totalorder %s58, 0
    %s61 = sadd.s32 %s60, 1
    %s62 = scalar_select %p59, %s60, %s61
    %p65 = pneg %p59
    %p66 = scmp.eq.s32.totalorder %s10, 1
    %p67 = por %p65, %p66
    %p68 = scmp.ne.s32.totalorder %s60, %s63
    %p69 = scmp.eq.s32.totalorder %s10, 0
    %p70 = por %p68, %p69
    %p71 = scmp.ne.s32.totalorder %s60, %s63
    %p72 = scmp.eq.s32.totalorder %s15, 1
    %p73 = por %p71, %p72
    %p74 = scmp.ne.s32.totalorder %s63, %s64
    %p75 = scmp.eq.s32.totalorder %s15, 0
    %p76 = por %p74, %p75
    %p77 = scmp.ne.s32.totalorder %s63, %s64
    %p78 = scmp.eq.s32.totalorder %s16, 1
    %p79 = por %p77, %p78
    %p81 = scmp.ne.s32.totalorder %s64, %s80
    %p82 = scmp.eq.s32.totalorder %s16, 0
    %p83 = por %p81, %p82
    %s84 = ssub.s32 %s17, %s29
    %p85 = scmp.eq.s32.totalorder %s84, 0
    %s87 = sadd.s32 %s86, 1
    %s88 = scalar_select %p85, %s86, %s87
    %p91 = pneg %p85
    %p92 = scmp.eq.s32.totalorder %s10, 1
    %p93 = por %p91, %p92
    %p94 = scmp.ne.s32.totalorder %s86, %s89
    %p95 = scmp.eq.s32.totalorder %s10, 0
    %p96 = por %p94, %p95
    %p97 = scmp.ne.s32.totalorder %s86, %s89
    %p98 = scmp.eq.s32.totalorder %s15, 1
    %p99 = por %p97, %p98
    %p100 = scmp.ne.s32.totalorder %s89, %s90
    %p101 = scmp.eq.s32.totalorder %s15, 0
    %p102 = por %p100, %p101
    %p103 = scmp.ne.s32.totalorder %s89, %s90
    %p104 = scmp.eq.s32.totalorder %s16, 1
    %p105 = por %p103, %p104
    %p107 = scmp.ne.s32.totalorder %s90, %s106
    %p108 = scmp.eq.s32.totalorder %s16, 0
    %p109 = por %p107, %p108
    %s110 = ssub.s32 %s17, %s29
    %s111 = ssub.s32 %s18, %s25
    %s112 = sor.u32 %s110, %s111
    %p113 = scmp.eq.s32.totalorder %s112, 0
    %s115 = sadd.s32 %s114, 1
    %s116 = scalar_select %p113, %s114, %s115
    %p119 = pneg %p113
    %p120 = scmp.eq.s32.totalorder %s10, 1
    %p121 = por %p119, %p120
    %p122 = scmp.ne.s32.totalorder %s114, %s117
    %p123 = scmp.eq.s32.totalorder %s10, 0
    %p124 = por %p122, %p123
    %p125 = scmp.ne.s32.totalorder %s114, %s117
    %p126 = scmp.eq.s32.totalorder %s15, 1
    %p127 = por %p125, %p126
    %p128 = scmp.ne.s32.totalorder %s117, %s118
    %p129 = scmp.eq.s32.totalorder %s15, 0
    %p130 = por %p128, %p129
    %p131 = scmp.ne.s32.totalorder %s117, %s118
    %p132 = scmp.eq.s32.totalorder %s16, 1
    %p133 = por %p131, %p132
    %p135 = scmp.ne.s32.totalorder %s118, %s134
    %p136 = scmp.eq.s32.totalorder %s16, 0
    %p137 = por %p135, %p136
    %s138 = ssub.s32 %s17, %s29
    %s139 = ssub.s32 %s18, %s25
    %s140 = sor.u32 %s138, %s139
    %p141 = scmp.eq.s32.totalorder %s140, 0
    %s143 = sadd.s32 %s142, 1
    %s144 = scalar_select %p141, %s142, %s143
    %p147 = pneg %p141
    %p148 = scmp.eq.s32.totalorder %s10, 1
    %p149 = por %p147, %p148
    %p150 = scmp.ne.s32.totalorder %s142, %s145
    %p151 = scmp.eq.s32.totalorder %s10, 0
    %p152 = por %p150, %p151
    %p153 = scmp.ne.s32.totalorder %s142, %s145
    %p154 = scmp.eq.s32.totalorder %s15, 1
    %p155 = por %p153, %p154
    %p156 = scmp.ne.s32.totalorder %s145, %s146
    %p157 = scmp.eq.s32.totalorder %s15, 0
    %p158 = por %p156, %p157
    %p159 = scmp.ne.s32.totalorder %s145, %s146
    %p160 = scmp.eq.s32.totalorder %s16, 1
    %p161 = por %p159, %p160
    %p163 = scmp.ne.s32.totalorder %s146, %s162
    %p164 = scmp.eq.s32.totalorder %s16, 0
    %p165 = por %p163, %p164
    %p166 = scmp.le.s32.totalorder 1, %s10
    %p167 = scmp.lt.s32.totalorder %s10, 3
    %p168 = pnand %p166, %p167
    %p169 = pneg %p168
    // Predicated region
    $region9: #{decoder_forward.20} parent=5 // pred_check
      _
    $region10: #{decoder_forward.20} parent=5 // pred_check_branch
      %171 = sbr.rel (%p168) target = $region12
    $region11: #{decoder_forward.20} parent=5 // pred_region
      %s172 = ssub.s32 %s10, 1
    $region12: #{decoder_forward.20} parent=5 // pred_fallthru
      _
    %p173 = scmp.lt.s32.totalorder %s10, 2
    // Predicated region
    $region13: #{decoder_forward.20} parent=5 // pred_check
      %p174 = pneg %p173
    $region14: #{decoder_forward.20} parent=5 // pred_check_branch
      %176 = sbr.rel (%p174) target = $region16
    $region15: #{decoder_forward.20} parent=5 // pred_region
      // Predicated region
      $region17: #{decoder_forward.20} parent=15 // pred_check
        %p177 = pneg %p44
      $region18: #{decoder_forward.20} parent=15 // pred_check_branch
        %179 = sbr.rel (%p177) target = $region20
      $region19: #{decoder_forward.20} parent=15 // pred_region
        %p180 = scmp.lt.s32.totalorder %s17, 1
        %s181 = scalar_select %p180, %s17, 1
        %p182 = scmp.lt.s32.totalorder %s18, 0
        %s183 = scalar_select %p182, %s18, 0
        %s184 = sadd.s32 %s183, %s181
        %s185 = smul.addr %s184, 8
        %s186 = scalar_lea.vmem %s0, %s185
      $region20: #{decoder_forward.20} parent=15 // pred_fallthru
        _
      // Predicated region
      $region21: #{decoder_forward.20} parent=15 // pred_check
        %p187 = pneg %p70
      $region22: #{decoder_forward.20} parent=15 // pred_check_branch
        %189 = sbr.rel (%p187) target = $region24
      $region23: #{decoder_forward.20} parent=15 // pred_region
        %p190 = scmp.lt.s32.totalorder %s17, 1
        %s191 = scalar_select %p190, %s17, 1
        %s192 = smul.addr %s191, 8
        %s193 = scalar_lea.vmem %s1, %s192
      $region24: #{decoder_forward.20} parent=15 // pred_fallthru
        _
      // Predicated region
      $region25: #{decoder_forward.20} parent=15 // pred_check
        %p194 = pneg %p96
      $region26: #{decoder_forward.20} parent=15 // pred_check_branch
        %196 = sbr.rel (%p194) target = $region28
      $region27: #{decoder_forward.20} parent=15 // pred_region
        %p197 = scmp.lt.s32.totalorder %s17, 1
        %s198 = scalar_select %p197, %s17, 1
        %s199 = smul.addr %s198, 8
        %s200 = scalar_lea.vmem %s2, %s199
      $region28: #{decoder_forward.20} parent=15 // pred_fallthru
        _
      // Predicated region
      $region29: #{decoder_forward.20} parent=15 // pred_check
        %p201 = pneg %p124
      $region30: #{decoder_forward.20} parent=15 // pred_check_branch
        %203 = sbr.rel (%p201) target = $region32
      $region31: #{decoder_forward.20} parent=15 // pred_region
        %p204 = scmp.lt.s32.totalorder %s17, 1
        %s205 = scalar_select %p204, %s17, 1
        %p206 = scmp.lt.s32.totalorder %s18, 0
        %s207 = scalar_select %p206, %s18, 0
        %s208 = sadd.s32 %s207, %s205
        %s209 = smul.addr %s208, 8
        %s210 = scalar_lea.vmem %s3, %s209
      $region32: #{decoder_forward.20} parent=15 // pred_fallthru
        _
    $region16: #{decoder_forward.20} parent=5 // pred_fallthru
      _
    %p211 = scmp.le.s32.totalorder 1, %s10
    %p212 = scmp.lt.s32.totalorder %s10, 3
    %p213 = pnand %p211, %p212
    %p214 = pneg %p213
    // Predicated region
    $region33: #{decoder_forward.20} parent=5 // pred_check
      _
    $region34: #{decoder_forward.20} parent=5 // pred_check_branch
      %216 = sbr.rel (%p213) target = $region36
    $region35: #{decoder_forward.20} parent=5 // pred_region
      %s217 = ssub.s32 %s10, 1
      %p218 = scmp.lt.s32.totalorder %s19, 1
      %s219 = scalar_select %p218, %s19, 1
      %p220 = scmp.lt.s32.totalorder %s20, 0
      %s221 = scalar_select %p220, %s20, 0
      %s222 = sadd.s32 %s221, %s219
      %s223 = smul.addr %s222, 8
      %s224 = scalar_lea.vmem %s0, %s223
      %p225 = pneg %p50
      %p226 = pneg %p47
      %p227 = scmp.lt.s32.totalorder %s19, 1
      %s228 = scalar_select %p227, %s19, 1
      %s229 = smul.addr %s228, 8
      %s230 = scalar_lea.vmem %s1, %s229
      %p231 = pneg %p76
      %p232 = pneg %p73
      %p233 = scmp.lt.s32.totalorder %s19, 1
      %s234 = scalar_select %p233, %s19, 1
      %s235 = smul.addr %s234, 8
      %s236 = scalar_lea.vmem %s2, %s235
      %p237 = pneg %p102
      %p238 = pneg %p99
      %p239 = scmp.lt.s32.totalorder %s19, 1
      %s240 = scalar_select %p239, %s19, 1
      %p241 = scmp.lt.s32.totalorder %s20, 0
      %s242 = scalar_select %p241, %s20, 0
      %s243 = sadd.s32 %s242, %s240
      %s244 = smul.addr %s243, 8
      %s245 = scalar_lea.vmem %s3, %s244
      %p246 = pneg %p130
      %p247 = pneg %p127
      %p248 = pneg %p158
      %p249 = pneg %p155
      %p250 = scmp.lt.s32.totalorder %s19, 1
      %s251 = scalar_select %p250, %s19, 1
      %p252 = scmp.lt.s32.totalorder %s20, 0
      %s253 = scalar_select %p252, %s20, 0
      %s254 = sadd.s32 %s253, %s251
      %s255 = smul.addr %s254, 8
      %s256 = scalar_lea.vmem %s4, %s255
      %p257 = scmp.lt.s32.totalorder %s19, 1
      %s258 = scalar_select %p257, %s19, 1
      %p259 = scmp.lt.s32.totalorder %s20, 0
      %s260 = scalar_select %p259, %s20, 0
      %s261 = sadd.s32 %s260, %s258
      %s262 = smul.addr %s261, 8
      %s263 = scalar_lea.vmem %s0, %s262
      %p264 = scmp.lt.s32.totalorder %s19, 1
      %s265 = scalar_select %p264, %s19, 1
      %s266 = smul.addr %s265, 8
      %s267 = scalar_lea.vmem %s1, %s266
      %p268 = scmp.lt.s32.totalorder %s19, 1
      %s269 = scalar_select %p268, %s19, 1
      %s270 = smul.addr %s269, 8
      %s271 = scalar_lea.vmem %s2, %s270
      %p272 = scmp.lt.s32.totalorder %s19, 1
      %s273 = scalar_select %p272, %s19, 1
      %p274 = scmp.lt.s32.totalorder %s20, 0
      %s275 = scalar_select %p274, %s20, 0
      %s276 = sadd.s32 %s275, %s273
      %s277 = smul.addr %s276, 8
      %s278 = scalar_lea.vmem %s3, %s277
      %p279 = scmp.lt.s32.totalorder %s19, 1
      %s280 = scalar_select %p279, %s19, 1
      %p281 = scmp.lt.s32.totalorder %s20, 0
      %s282 = scalar_select %p281, %s20, 0
      %s283 = sadd.s32 %s282, %s280
      %s284 = smul.addr %s283, 8
      %s285 = scalar_lea.vmem %s4, %s284
      %v287 = vld [vmem:[%s263] sm:$0xff]
      %v288 = vld [vmem:[%s267] sm:$0xff]
      %v289 = vld [vmem:[%s271] sm:$0xff]
      %v290 = vld [vmem:[%s278] sm:$0xff]
      %v291 = vpack.c.bf16 %v287, %v287
      %v292 = vpack.c.bf16 %v288, %v288
      %v293 = vpack.c.bf16 %v289, %v289
      %vm294 = vcmask 64512
      %v296 = vsel %vm294, %v291, 0
      %v299 = vsel %vm294, %v292, 0
      %301 = vmatpush.bf16.xpose.msra.mxu0 0
      %302 = vmatpush.bf16.xpose.msra.mxu0 0
      %303 = vmatpush.bf16.xpose.msra.mxu0 0
      %304 = vmatpush.bf16.xpose.msra.mxu0 0
      %305 = vmatpush.bf16.xpose.msra.mxu0 0
      %306 = vmatpush.bf16.xpose.msra.mxu0 0
      %307 = vmatpush.bf16.xpose.msra.mxu0 0
      %308 = vmatpush.bf16.xpose.msra.mxu0 %v299
      %309 = vmatmul.bf16.gmra.mxu0 %v296
      %v310 = vpop.f32.mrf.mxu0
      %v311 = vadd.f32 0.0, %v310
      %v312 = vpop.f32.mrf.mxu0
      %313 = vdwg.mxu0
      %v314 = vmul.f32 %v311, 0.35355338
      %v315 = vadd.f32 %v314, %v290
      %v316 = vsel %vm294, %v315, -inf
      %317 = vmax.xlane.f32.xlu0 %v316
      %v318 = vpop.xlane.xlu0 %317
      %v319 = vsub.f32 %v315, %v318
      %v320 = vmul.f32 %v319, 1.442695
      %v321 = vpow.pop %v320
      %v322 = vsel %vm294, %v321, 0.0
      %323 = vadd.xlane.f32.xlu0 %v322
      %v324 = vpop.xlane.xlu0 %323
      %v325 = vrcp.pop %v324
      %v326 = vmul.f32 %v321, %v325
      %v327 = vpack.c.bf16 %v326, %v326
      %v329 = vsel %vm294, %v327, 0
      %vm331 = vcmask 1043456
      %v333 = vsel %vm331, %v293, 0
      %335 = vmatpush.bf16.msra.mxu0 0
      %336 = vmatpush.bf16.msra.mxu0 0
      %337 = vmatpush.bf16.msra.mxu0 0
      %338 = vmatpush.bf16.msra.mxu0 0
      %339 = vmatpush.bf16.msra.mxu0 0
      %340 = vmatpush.bf16.msra.mxu0 0
      %341 = vmatpush.bf16.msra.mxu0 0
      %342 = vmatpush.bf16.msra.mxu0 %v333
      %343 = vmatmul.bf16.gmra.mxu0 %v329
      %v344 = vpop.f32.mrf.mxu0
      %v345 = vadd.f32 0.0, %v344
      %v346 = vpop.f32.mrf.mxu0
      %347 = vdwg.mxu0
      %349 = vrot.lane.b32.xlu0 %v291, 120
      %v350 = vpop.permute.xlu0 %349
      %352 = vrot.lane.b32.xlu0 %v292, 120
      %v353 = vpop.permute.xlu0 %352
      %v355 = vsel %vm294, %v350, 0
      %v358 = vsel %vm294, %v353, 0
      %360 = vmatpush.bf16.xpose.msra.mxu0 0
      %361 = vmatpush.bf16.xpose.msra.mxu0 0
      %362 = vmatpush.bf16.xpose.msra.mxu0 0
      %363 = vmatpush.bf16.xpose.msra.mxu0 0
      %364 = vmatpush.bf16.xpose.msra.mxu0 0
      %365 = vmatpush.bf16.xpose.msra.mxu0 0
      %366 = vmatpush.bf16.xpose.msra.mxu0 0
      %367 = vmatpush.bf16.xpose.msra.mxu0 %v358
      %368 = vmatmul.bf16.gmra.mxu0 %v355
      %v369 = vpop.f32.mrf.mxu0
      %v370 = vadd.f32 0.0, %v369
      %v371 = vpop.f32.mrf.mxu0
      %372 = vdwg.mxu0
      %v373 = vmul.f32 %v370, 0.35355338
      %v374 = vadd.f32 %v373, %v290
      %v375 = vsel %vm294, %v374, -inf
      %376 = vmax.xlane.f32.xlu0 %v375
      %v377 = vpop.xlane.xlu0 %376
      %v378 = vsub.f32 %v374, %v377
      %v379 = vmul.f32 %v378, 1.442695
      %v380 = vpow.pop %v379
      %v381 = vsel %vm294, %v380, 0.0
      %382 = vadd.xlane.f32.xlu0 %v381
      %v383 = vpop.xlane.xlu0 %382
      %v384 = vrcp.pop %v383
      %v385 = vmul.f32 %v380, %v384
      %v386 = vpack.c.bf16 %v385, %v385
      %388 = vrot.lane.b32.xlu0 %v293, 120
      %v389 = vpop.permute.xlu0 %388
      %v391 = vsel %vm294, %v386, 0
      %v394 = vsel %vm331, %v389, 0
      %396 = vmatpush.bf16.msra.mxu0 0
      %397 = vmatpush.bf16.msra.mxu0 0
      %398 = vmatpush.bf16.msra.mxu0 0
      %399 = vmatpush.bf16.msra.mxu0 0
      %400 = vmatpush.bf16.msra.mxu0 0
      %401 = vmatpush.bf16.msra.mxu0 0
      %402 = vmatpush.bf16.msra.mxu0 0
      %403 = vmatpush.bf16.msra.mxu0 %v394
      %404 = vmatmul.bf16.gmra.mxu0 %v391
      %v405 = vpop.f32.mrf.mxu0
      %v406 = vadd.f32 0.0, %v405
      %v407 = vpop.f32.mrf.mxu0
      %408 = vdwg.mxu0
      %409 = vrot.lane.b32.xlu0 %v291, 112
      %v410 = vpop.permute.xlu0 %409
      %411 = vrot.lane.b32.xlu0 %v292, 112
      %v412 = vpop.permute.xlu0 %411
      %v414 = vsel %vm294, %v410, 0
      %v417 = vsel %vm294, %v412, 0
      %419 = vmatpush.bf16.xpose.msra.mxu0 0
      %420 = vmatpush.bf16.xpose.msra.mxu0 0
      %421 = vmatpush.bf16.xpose.msra.mxu0 0
      %422 = vmatpush.bf16.xpose.msra.mxu0 0
      %423 = vmatpush.bf16.xpose.msra.mxu0 0
      %424 = vmatpush.bf16.xpose.msra.mxu0 0
      %425 = vmatpush.bf16.xpose.msra.mxu0 0
      %426 = vmatpush.bf16.xpose.msra.mxu0 %v417
      %427 = vmatmul.bf16.gmra.mxu0 %v414
      %v428 = vpop.f32.mrf.mxu0
      %v429 = vadd.f32 0.0, %v428
      %v430 = vpop.f32.mrf.mxu0
      %431 = vdwg.mxu0
      %v432 = vmul.f32 %v429, 0.35355338
      %v433 = vadd.f32 %v432, %v290
      %v434 = vsel %vm294, %v433, -inf
      %435 = vmax.xlane.f32.xlu0 %v434
      %v436 = vpop.xlane.xlu0 %435
      %v437 = vsub.f32 %v433, %v436
      %v438 = vmul.f32 %v437, 1.442695
      %v439 = vpow.pop %v438
      %v440 = vsel %vm294, %v439, 0.0
      %441 = vadd.xlane.f32.xlu0 %v440
      %v442 = vpop.xlane.xlu0 %441
      %v443 = vrcp.pop %v442
      %v444 = vmul.f32 %v439, %v443
      %v445 = vpack.c.bf16 %v444, %v444
      %446 = vrot.lane.b32.xlu0 %v293, 112
      %v447 = vpop.permute.xlu0 %446
      %v449 = vsel %vm294, %v445, 0
      %v452 = vsel %vm331, %v447, 0
      %454 = vmatpush.bf16.msra.mxu0 0
      %455 = vmatpush.bf16.msra.mxu0 0
      %456 = vmatpush.bf16.msra.mxu0 0
      %457 = vmatpush.bf16.msra.mxu0 0
      %458 = vmatpush.bf16.msra.mxu0 0
      %459 = vmatpush.bf16.msra.mxu0 0
      %460 = vmatpush.bf16.msra.mxu0 0
      %461 = vmatpush.bf16.msra.mxu0 %v452
      %462 = vmatmul.bf16.gmra.mxu0 %v449
      %v463 = vpop.f32.mrf.mxu0
      %v464 = vadd.f32 0.0, %v463
      %v465 = vpop.f32.mrf.mxu0
      %466 = vdwg.mxu0
      %467 = vrot.lane.b32.xlu0 %v291, 104
      %v468 = vpop.permute.xlu0 %467
      %469 = vrot.lane.b32.xlu0 %v292, 104
      %v470 = vpop.permute.xlu0 %469
      %v472 = vsel %vm294, %v468, 0
      %v475 = vsel %vm294, %v470, 0
      %477 = vmatpush.bf16.xpose.msra.mxu0 0
      %478 = vmatpush.bf16.xpose.msra.mxu0 0
      %479 = vmatpush.bf16.xpose.msra.mxu0 0
      %480 = vmatpush.bf16.xpose.msra.mxu0 0
      %481 = vmatpush.bf16.xpose.msra.mxu0 0
      %482 = vmatpush.bf16.xpose.msra.mxu0 0
      %483 = vmatpush.bf16.xpose.msra.mxu0 0
      %484 = vmatpush.bf16.xpose.msra.mxu0 %v475
      %485 = vmatmul.bf16.gmra.mxu0 %v472
      %v486 = vpop.f32.mrf.mxu0
      %v487 = vadd.f32 0.0, %v486
      %v488 = vpop.f32.mrf.mxu0
      %489 = vdwg.mxu0
      %v490 = vmul.f32 %v487, 0.35355338
      %v491 = vadd.f32 %v490, %v290
      %v492 = vsel %vm294, %v491, -inf
      %493 = vmax.xlane.f32.xlu0 %v492
      %v494 = vpop.xlane.xlu0 %493
      %v495 = vsub.f32 %v491, %v494
      %v496 = vmul.f32 %v495, 1.442695
      %v497 = vpow.pop %v496
      %v498 = vsel %vm294, %v497, 0.0
      %499 = vadd.xlane.f32.xlu0 %v498
      %v500 = vpop.xlane.xlu0 %499
      %v501 = vrcp.pop %v500
      %v502 = vmul.f32 %v497, %v501
      %v503 = vpack.c.bf16 %v502, %v502
      %504 = vrot.lane.b32.xlu0 %v293, 104
      %v505 = vpop.permute.xlu0 %504
      %v507 = vsel %vm294, %v503, 0
      %v510 = vsel %vm331, %v505, 0
      %512 = vmatpush.bf16.msra.mxu0 0
      %513 = vmatpush.bf16.msra.mxu0 0
      %514 = vmatpush.bf16.msra.mxu0 0
      %515 = vmatpush.bf16.msra.mxu0 0
      %516 = vmatpush.bf16.msra.mxu0 0
      %517 = vmatpush.bf16.msra.mxu0 0
      %518 = vmatpush.bf16.msra.mxu0 0
      %519 = vmatpush.bf16.msra.mxu0 %v510
      %520 = vmatmul.bf16.gmra.mxu0 %v507
      %v521 = vpop.f32.mrf.mxu0
      %v522 = vadd.f32 0.0, %v521
      %v523 = vpop.f32.mrf.mxu0
      %524 = vdwg.mxu0
      %526 = vrot.lane.b32.xlu0 %v406, 8
      %v527 = vpop.permute.xlu0 %526
      %530 = vrot.lane.b32.xlu0 %v464, 16
      %v531 = vpop.permute.xlu0 %530
      %534 = vrot.lane.b32.xlu0 %v522, 24
      %v535 = vpop.permute.xlu0 %534
      %v537 = vsel %vm294, %v345, %v527
      %vm538 = vcmask 130048
      %v539 = vsel %vm538, %v537, %v531
      %vm540 = vcmask 195584
      %v541 = vsel %vm540, %v539, %v535
      %vm542 = vcmask 261120
      %543 = vst.msk [vmem:[%s285] sm:$0xff] %vm542, %v541
      %p544 = scmp.lt.s32.totalorder %s19, 1
      %s545 = scalar_select %p544, %s19, 1
      %p546 = scmp.lt.s32.totalorder %s20, 0
      %s547 = scalar_select %p546, %s20, 0
      %s548 = sadd.s32 %s547, %s545
      %s549 = smul.addr %s548, 8
      %s550 = scalar_lea.vmem %s4, %s549
      // Predicated region
      $region37: #{decoder_forward.20} parent=35 // pred_check
        %p551 = pneg %p155
      $region38: #{decoder_forward.20} parent=35 // pred_check_branch
        %553 = sbr.rel (%p551) target = $region40
      $region39: #{decoder_forward.20} parent=35 // pred_region
        _
      $region40: #{decoder_forward.20} parent=35 // pred_fallthru
        _
    $region36: #{decoder_forward.20} parent=5 // pred_fallthru
      _
    %p554 = scmp.le.s32.totalorder 2, %s10
    // Predicated region
    $region41: #{decoder_forward.20} parent=5 // pred_check
      %p555 = pneg %p554
    $region42: #{decoder_forward.20} parent=5 // pred_check_branch
      %557 = sbr.rel (%p555) target = $region44
    $region43: #{decoder_forward.20} parent=5 // pred_region
      %s558 = ssub.s32 %s10, 2
      // Predicated region
      $region45: #{decoder_forward.20} parent=43 // pred_check
        %p559 = pneg %p161
      $region46: #{decoder_forward.20} parent=43 // pred_check_branch
        %561 = sbr.rel (%p559) target = $region48
      $region47: #{decoder_forward.20} parent=43 // pred_region
        %p562 = scmp.lt.s32.totalorder %s21, 1
        %s563 = scalar_select %p562, %s21, 1
        %p564 = scmp.lt.s32.totalorder %s22, 0
        %s565 = scalar_select %p564, %s22, 0
        %s566 = sadd.s32 %s565, %s563
        %s567 = smul.addr %s566, 8
        %s568 = scalar_lea.vmem %s4, %s567
      $region48: #{decoder_forward.20} parent=43 // pred_fallthru
        _
    $region44: #{decoder_forward.20} parent=5 // pred_fallthru
      _
  $region6: #{decoder_forward.20} parent=0 // loop_footer
    %s14 = sadd.s32 1, %s10
  $region7: #{decoder_forward.20} parent=0 // loop_footer_branch
    %9 = sbr.rel target = $region3
  $region8: #{decoder_forward.20} parent=0 // loop_exit
    _

// kernel: decoder_forward.27
$region0: #{decoder_forward.27}
  #allocation0 [shape = 'u32[]', space=smem, size = 0x4, offset = 0x4, fixed_abs, tag = 'smem constant byte address 0x4 - core index']
  #allocation1 [shape = 'u32[72,128]{1,0:T(1,128)}', space=vmem, size = 0x9000, scoped, tag = 'internal scratch']
  %s0 = inlined_call_operand.vmem [shape: f32[16,128], index: 0, kind: input, shape index: {}]
  %s1 = inlined_call_operand.vmem [shape: bf16[128,128], index: 1, kind: input, shape index: {}]
  %s2 = inlined_call_operand.vmem [shape: f32[1,128], index: 2, kind: input, shape index: {}]
  %s3 = inlined_call_operand.vmem [shape: bf16[128,128], index: 3, kind: input, shape index: {}]
  %s4 = inlined_call_operand.vmem [shape: f32[1,128], index: 4, kind: input, shape index: {}]
  %s5 = inlined_call_operand.vmem [shape: f32[1,128], index: 5, kind: input, shape index: {}]
  %s6 = inlined_call_operand.vmem [shape: f32[1,128], index: 6, kind: input, shape index: {}]
  %s7 = inlined_call_operand.vmem [shape: f32[16,128], index: 7, kind: output, shape index: {}]
  %s8 = sld [smem:[#allocation0]]
  $region38: #{decoder_forward.27} parent=0
    _
  %s10 = ssub.s32 1, %s8
  %s11 = scalar_select 0, %s10, %s8
  // Predicated region
  $region2: #{decoder_forward.27} parent=0 // pred_check
    _
  $region3: #{decoder_forward.27} parent=0 // pred_check_branch
    %13 = sbr.rel (0) target = $region5
  $region4: #{decoder_forward.27} parent=0 // pred_region
    _
  $region5: #{decoder_forward.27} parent=0 // pred_fallthru
    _
  // Predicated region
  $region6: #{decoder_forward.27} parent=0 // pred_check
    _
  $region7: #{decoder_forward.27} parent=0 // pred_check_branch
    %15 = sbr.rel (0) target = $region9
  $region8: #{decoder_forward.27} parent=0 // pred_region
    _
  $region9: #{decoder_forward.27} parent=0 // pred_fallthru
    _
  // Predicated region
  $region10: #{decoder_forward.27} parent=0 // pred_check
    _
  $region11: #{decoder_forward.27} parent=0 // pred_check_branch
    %17 = sbr.rel (0) target = $region13
  $region12: #{decoder_forward.27} parent=0 // pred_region
    _
  $region13: #{decoder_forward.27} parent=0 // pred_fallthru
    _
  // Predicated region
  $region14: #{decoder_forward.27} parent=0 // pred_check
    _
  $region15: #{decoder_forward.27} parent=0 // pred_check_branch
    %19 = sbr.rel (0) target = $region17
  $region16: #{decoder_forward.27} parent=0 // pred_region
    _
  $region17: #{decoder_forward.27} parent=0 // pred_fallthru
    _
  // Predicated region
  $region18: #{decoder_forward.27} parent=0 // pred_check
    _
  $region19: #{decoder_forward.27} parent=0 // pred_check_branch
    %21 = sbr.rel (0) target = $region21
  $region20: #{decoder_forward.27} parent=0 // pred_region
    _
  $region21: #{decoder_forward.27} parent=0 // pred_fallthru
    _
  // Predicated region
  $region22: #{decoder_forward.27} parent=0 // pred_check
    _
  $region23: #{decoder_forward.27} parent=0 // pred_check_branch
    %23 = sbr.rel (0) target = $region25
  $region24: #{decoder_forward.27} parent=0 // pred_region
    _
  $region25: #{decoder_forward.27} parent=0 // pred_fallthru
    _
  // Predicated region
  $region26: #{decoder_forward.27} parent=0 // pred_check
    _
  $region27: #{decoder_forward.27} parent=0 // pred_check_branch
    %25 = sbr.rel (0) target = $region29
  $region28: #{decoder_forward.27} parent=0 // pred_region
    _
  $region29: #{decoder_forward.27} parent=0 // pred_fallthru
    _
  %v26 = vld [vmem:[%s0] sm:$0xff]
  %v27 = vld [vmem:[%s0 + $0x8] sm:$0xff]
  %v28 = vpack.c.bf16 %v27, %v26
  %v29 = vld [vmem:[%s1] sm:$0xf]
  %v30 = vld [vmem:[%s1 + $0x4] sm:$0xf]
  %v31 = vld [vmem:[%s1 + $0x8] sm:$0xf]
  %v32 = vld [vmem:[%s1 + $0xc] sm:$0xf]
  %v33 = vld [vmem:[%s1 + $0x10] sm:$0xf]
  %v34 = vld [vmem:[%s1 + $0x14] sm:$0xf]
  %v35 = vld [vmem:[%s1 + $0x18] sm:$0xf]
  %v36 = vld [vmem:[%s1 + $0x1c] sm:$0xf]
  %v37 = vld [vmem:[%s1 + $0x20] sm:$0xf]
  %v38 = vld [vmem:[%s1 + $0x24] sm:$0xf]
  %v39 = vld [vmem:[%s1 + $0x28] sm:$0xf]
  %v40 = vld [vmem:[%s1 + $0x2c] sm:$0xf]
  %v41 = vld [vmem:[%s1 + $0x30] sm:$0xf]
  %v42 = vld [vmem:[%s1 + $0x34] sm:$0xf]
  %v43 = vld [vmem:[%s1 + $0x38] sm:$0xf]
  %v44 = vld [vmem:[%s1 + $0x3c] sm:$0xf]
  %v45 = vld [vmem:[%s2] sm:$0x1]
  %v47 = vperm.slane %v45, 0
  %v65 = vunpack.c.l.b16 %v29
  %v66 = vunpack.c.l.b16 %v30
  %v67 = vunpack.c.l.b16 %v31
  %v68 = vunpack.c.l.b16 %v32
  %v69 = vunpack.c.l.b16 %v33
  %v70 = vunpack.c.l.b16 %v34
  %v71 = vunpack.c.l.b16 %v35
  %v72 = vunpack.c.l.b16 %v36
  %v73 = vunpack.c.l.b16 %v37
  %v74 = vunpack.c.l.b16 %v38
  %v75 = vunpack.c.l.b16 %v39
  %v76 = vunpack.c.l.b16 %v40
  %v77 = vunpack.c.l.b16 %v41
  %v78 = vunpack.c.l.b16 %v42
  %v79 = vunpack.c.l.b16 %v43
  %v80 = vunpack.c.l.b16 %v44
  %v81 = vpack.c.b16 %v66, %v65
  %v82 = vpack.c.b16 %v68, %v67
  %v83 = vpack.c.b16 %v70, %v69
  %v84 = vpack.c.b16 %v72, %v71
  %v85 = vpack.c.b16 %v74, %v73
  %v86 = vpack.c.b16 %v76, %v75
  %v87 = vpack.c.b16 %v78, %v77
  %v88 = vpack.c.b16 %v80, %v79
  %97 = vmatpush.bf16.msra.mxu0 %v88
  %98 = vmatpush.bf16.msra.mxu0 %v87
  %99 = vmatpush.bf16.msra.mxu0 %v86
  %100 = vmatpush.bf16.msra.mxu0 %v85
  %101 = vmatpush.bf16.msra.mxu0 %v84
  %102 = vmatpush.bf16.msra.mxu0 %v83
  %103 = vmatpush.bf16.msra.mxu0 %v82
  %104 = vmatpush.bf16.msra.mxu0 %v81
  %105 = vmatmul.bf16.gmra.mxu0 %v28
  %v106 = vpop.f32.mrf.mxu0
  %v107 = vadd.f32 %v47, %v106
  %v108 = vpop.f32.mrf.mxu0
  %v109 = vadd.f32 %v47, %v108
  %110 = vdwg.mxu0
  %v111 = vmax.f32 %v107, 0.0
  %v112 = vmax.f32 %v109, 0.0
  %v113 = vpack.c.bf16 %v112, %v111
  %v114 = vld [vmem:[%s3] sm:$0xf]
  %v115 = vld [vmem:[%s3 + $0x4] sm:$0xf]
  %v116 = vld [vmem:[%s3 + $0x8] sm:$0xf]
  %v117 = vld [vmem:[%s3 + $0xc] sm:$0xf]
  %v118 = vld [vmem:[%s3 + $0x10] sm:$0xf]
  %v119 = vld [vmem:[%s3 + $0x14] sm:$0xf]
  %v120 = vld [vmem:[%s3 + $0x18] sm:$0xf]
  %v121 = vld [vmem:[%s3 + $0x1c] sm:$0xf]
  %v122 = vld [vmem:[%s3 + $0x20] sm:$0xf]
  %v123 = vld [vmem:[%s3 + $0x24] sm:$0xf]
  %v124 = vld [vmem:[%s3 + $0x28] sm:$0xf]
  %v125 = vld [vmem:[%s3 + $0x2c] sm:$0xf]
  %v126 = vld [vmem:[%s3 + $0x30] sm:$0xf]
  %v127 = vld [vmem:[%s3 + $0x34] sm:$0xf]
  %v128 = vld [vmem:[%s3 + $0x38] sm:$0xf]
  %v129 = vld [vmem:[%s3 + $0x3c] sm:$0xf]
  %v130 = vld [vmem:[%s4] sm:$0x1]
  %v132 = vperm.slane %v130, 0
  %v150 = vunpack.c.l.b16 %v114
  %v151 = vunpack.c.l.b16 %v115
  %v152 = vunpack.c.l.b16 %v116
  %v153 = vunpack.c.l.b16 %v117
  %v154 = vunpack.c.l.b16 %v118
  %v155 = vunpack.c.l.b16 %v119
  %v156 = vunpack.c.l.b16 %v120
  %v157 = vunpack.c.l.b16 %v121
  %v158 = vunpack.c.l.b16 %v122
  %v159 = vunpack.c.l.b16 %v123
  %v160 = vunpack.c.l.b16 %v124
  %v161 = vunpack.c.l.b16 %v125
  %v162 = vunpack.c.l.b16 %v126
  %v163 = vunpack.c.l.b16 %v127
  %v164 = vunpack.c.l.b16 %v128
  %v165 = vunpack.c.l.b16 %v129
  %v166 = vpack.c.b16 %v151, %v150
  %v167 = vpack.c.b16 %v153, %v152
  %v168 = vpack.c.b16 %v155, %v154
  %v169 = vpack.c.b16 %v157, %v156
  %v170 = vpack.c.b16 %v159, %v158
  %v171 = vpack.c.b16 %v161, %v160
  %v172 = vpack.c.b16 %v163, %v162
  %v173 = vpack.c.b16 %v165, %v164
  %182 = vmatpush.bf16.msra.mxu0 %v173
  %183 = vmatpush.bf16.msra.mxu0 %v172
  %184 = vmatpush.bf16.msra.mxu0 %v171
  %185 = vmatpush.bf16.msra.mxu0 %v170
  %186 = vmatpush.bf16.msra.mxu0 %v169
  %187 = vmatpush.bf16.msra.mxu0 %v168
  %188 = vmatpush.bf16.msra.mxu0 %v167
  %189 = vmatpush.bf16.msra.mxu0 %v166
  %190 = vmatmul.bf16.gmra.mxu0 %v113
  %v191 = vpop.f32.mrf.mxu0
  %v192 = vadd.f32 %v132, %v191
  %v193 = vpop.f32.mrf.mxu0
  %v194 = vadd.f32 %v132, %v193
  %195 = vdwg.mxu0
  %v196 = vadd.f32 %v192, %v26
  %v197 = vadd.f32 %v194, %v27
  %v198 = vld [vmem:[%s5] sm:$0x1]
  %v199 = vld [vmem:[%s6] sm:$0x1]
  %200 = vadd.xlane.f32.xlu0 %v196
  %v201 = vpop.xlane.xlu0 %200
  %202 = vadd.xlane.f32.xlu0 %v197
  %v203 = vpop.xlane.xlu0 %202
  %v204 = vmul.f32 %v201, 0.03125
  %v205 = vmul.f32 %v203, 0.03125
  %v206 = vmul.f32 %v196, %v196
  %v207 = vmul.f32 %v197, %v197
  %208 = vadd.xlane.f32.xlu0 %v206
  %v209 = vpop.xlane.xlu0 %208
  %210 = vadd.xlane.f32.xlu0 %v207
  %v211 = vpop.xlane.xlu0 %210
  %v212 = vmul.f32 %v209, 0.03125
  %v213 = vmul.f32 %v211, 0.03125
  %v214 = vmul.f32 %v204, %v204
  %v215 = vmul.f32 %v205, %v205
  %v216 = vsub.f32 %v212, %v214
  %v217 = vsub.f32 %v213, %v215
  %v218 = vsub.f32 %v196, %v204
  %v219 = vsub.f32 %v197, %v205
  %v220 = vadd.f32 %v216, 1e-12
  %v221 = vadd.f32 %v217, 1e-12
  %v222 = vrsqrt.pop %v220
  %v223 = vmul.f32 %v222, %v220
  %v224 = vmul.f32 %v223, %v222
  %v225 = vmul.f32 0.5, %v224
  %v226 = vsub.f32 1.5, %v225
  %v227 = vmul.f32 %v222, %v226
  %vm228 = vweird.f32 %v220
  %vm229 = vweird.f32 %v222
  %vm230 = vmor %vm228, %vm229
  %v231 = vsel %vm230, %v222, %v227
  %v232 = vrsqrt.pop %v221
  %v233 = vmul.f32 %v232, %v221
  %v234 = vmul.f32 %v233, %v232
  %v235 = vmul.f32 0.5, %v234
  %v236 = vsub.f32 1.5, %v235
  %v237 = vmul.f32 %v232, %v236
  %vm238 = vweird.f32 %v221
  %vm239 = vweird.f32 %v232
  %vm240 = vmor %vm238, %vm239
  %v241 = vsel %vm240, %v232, %v237
  %v242 = vmul.f32 %v218, %v231
  %v243 = vmul.f32 %v219, %v241
  %v245 = vperm.slane %v198, 0
  %v247 = vmul.f32 %v245, %v242
  %v248 = vmul.f32 %v245, %v243
  %v250 = vperm.slane %v199, 0
  %v252 = vadd.f32 %v247, %v250
  %v253 = vadd.f32 %v248, %v250
  %254 = vst [vmem:[%s7] sm:$0xff] %v252
  %255 = vst [vmem:[%s7 + $0x8] sm:$0xff] %v253
  // Predicated region
  $region30: #{decoder_forward.27} parent=0 // pred_check
    _
  $region31: #{decoder_forward.27} parent=0 // pred_check_branch
    %257 = sbr.rel (0) target = $region33
  $region32: #{decoder_forward.27} parent=0 // pred_region
    _
  $region33: #{decoder_forward.27} parent=0 // pred_fallthru
    _
  // Predicated region
  $region34: #{decoder_forward.27} parent=0 // pred_check
    _
  $region35: #{decoder_forward.27} parent=0 // pred_check_branch
    %259 = sbr.rel (0) target = $region37
  $region36: #{decoder_forward.27} parent=0 // pred_region
    _
  $region37: #{decoder_forward.27} parent=0 // pred_fallthru
    _

</llo_original>
